<compile_context>
chip_gen: v7x
topology: tpu7x:2x2x1
jax: 0.10.0
libtpu: 0.0.40
codegen_flags: <defaults>
</compile_context>

<pallas_src>
import math
import functools

import jax
import jax.numpy as jnp
from jax.experimental import pallas as pl
from jax.experimental.pallas import tpu as pltpu

F32 = jnp.float32
BN_EPS = 1e-5          # torch.nn.BatchNorm2d default eps
NRM_EPS = 1e-12        # torch.nn.functional.normalize default eps
NUM_HEADS = 8          # GraphAttention(K=node_dim//8, d=8): 8 heads of size node_dim//8
ATTN_SCALE = 1.0 / math.sqrt(8.0)   # torch: attention /= self.d ** 0.5 with d == 8


def _resident_spec():
    # Grid-invariant operand: whole array lives in VMEM once for the entire grid,
    # no per-step double buffering.
    return pl.BlockSpec(memory_space=pltpu.MemorySpace.VMEM)


def _compiler_params():
    return pltpu.CompilerParams(
        dimension_semantics=("parallel",),       # shard batch grid across TCs (v7x megacore)
        vmem_limit_bytes=48 * 1024 * 1024)       # headroom under v7x's 64 MiB physical VMEM


# ---------------------------------------------------------------------------
# Pass 1: `nodes` conv stack + fused q/k/v projection (pre-BatchNorm).
# ---------------------------------------------------------------------------
def nodes_qkv_kernel(x_ref, w1_ref, b1_ref, w2_ref, b2_ref, w3_ref, b3_ref,
                     wqkv_ref, bqkv_ref, qkv_ref):
    # x_ref: (N, T*C), column index = t*C + ci (one batch item).
    x = x_ref[...]
    h1 = jnp.maximum(
        jnp.dot(x, w1_ref[...], preferred_element_type=F32) + b1_ref[...], 0.0)
    h2 = jnp.maximum(
        jnp.dot(h1, w2_ref[...], preferred_element_type=F32) + b2_ref[...], 0.0)
    nodes = jnp.dot(h2, w3_ref[...], preferred_element_type=F32) + b3_ref[...]   # (N, D)
    # Fused q/k/v projection: one (D, 3D) matmul -> one MXU launch, 3x wider lanes.
    qkv_ref[...] = (jnp.dot(nodes, wqkv_ref[...], preferred_element_type=F32)
                    + bqkv_ref[...])                                              # (N, 3D)


# ---------------------------------------------------------------------------
# Pass 2: BN+ReLU (stats precomputed), multi-head attention, output projection.
# ---------------------------------------------------------------------------
def attention_kernel(qkv_ref, mean_ref, rstd_ref, hmask_ref, wo_ref, bo_ref,
                     z_ref, *, N, D, H, scale):
    # Train-mode BatchNorm2d (gamma=1, beta=0) + ReLU; per-channel stats over all
    # B*N rows were computed once between passes.
    qkv = jnp.maximum((qkv_ref[...] - mean_ref[...]) * rstd_ref[...], 0.0)   # (N, 3D)
    q = qkv[:, 0:D]
    k = qkv[:, D:2 * D]
    v = qkv[:, 2 * D:3 * D]

    hm = hmask_ref[...]                                                # (H, D) precomputed
    # Heads as feature masks stacked along rows: all H per-head (N, N) score blocks
    # come from ONE contraction over D (mask one operand only -> exact).
    q_h = (q[None, :, :] * hm[:, None, :]).reshape(H * N, D)          # (H*N, D)
    scores = jax.lax.dot_general(q_h, k, (((1,), (1,)), ((), ())),
                                 preferred_element_type=F32) * scale  # (H*N, N)
    scores = scores - jnp.max(scores, axis=-1, keepdims=True)
    p = jnp.exp(scores)
    attn = p * (1.0 / jnp.sum(p, axis=-1, keepdims=True))             # softmax(dim=-1)

    ctx = jnp.dot(attn, v, preferred_element_type=F32)                # (H*N, D)
    # "concat heads along features" == per-head column mask + sum over head axis
    # (columns of attn_h @ V are independent, so this is exact).
    ctx_cat = jnp.sum(ctx.reshape(H, N, D) * hm[:, None, :], axis=0)  # (N, D)
    z_ref[...] = (jnp.dot(ctx_cat, wo_ref[...], preferred_element_type=F32)
                  + bo_ref[...])                                      # (N, D) pre-BN


# ---------------------------------------------------------------------------
# Pass 3: BN+ReLU, masked outer product, the two F.normalize(dim=-1) steps.
# ---------------------------------------------------------------------------
def graph_kernel(z_ref, mean_ref, rstd_ref, pg_ref, pmask_ref, out_ref):
    m = jnp.maximum((z_ref[...] - mean_ref[...]) * rstd_ref[...], 0.0)    # (N, D)
    A = jax.lax.dot_general(m, m, (((1,), (1,)), ((), ())),
                            preferred_element_type=F32)                   # (N, N)
    A = A * pmask_ref[...]
    inv1 = 1.0 / jnp.maximum(
        jnp.sqrt(jnp.sum(A * A, axis=-1, keepdims=True)), NRM_EPS)
    A = A * inv1                                          # F.normalize(A_mi, dim=-1)
    dyn = jnp.maximum(pg_ref[...] + A, 0.0)               # relu(pre_graph + A_mi)
    inv2 = 1.0 / jnp.maximum(
        jnp.sqrt(jnp.sum(dyn * dyn, axis=-1, keepdims=True)), NRM_EPS)
    out_ref[...] = dyn * inv2                             # final F.normalize(dim=-1)


# ---------------------------------------------------------------------------
# Forward wrapper: three batch-parallel pallas_calls + tiny BN-stat reductions.
# ---------------------------------------------------------------------------
def adaptive_graph_learner(inputs, pre_graph, prep):
    B, T, N, C = inputs.shape
    D = prep["wo"].shape[0]
    H = NUM_HEADS
    cp = _compiler_params()

    # (B, T, N, C) -> (B*N, T*C) with column index t*C + ci.
    x_flat = jnp.transpose(inputs, (0, 2, 1, 3)).reshape(B * N, T * C)

    # ---- pass 1: nodes conv stack + fused q/k/v projection ----------------
    qkv_pre = pl.pallas_call(
        nodes_qkv_kernel,
        out_shape=jax.ShapeDtypeStruct((B * N, 3 * D), F32),
        grid=(B,),
        in_specs=[pl.BlockSpec((N, T * C), lambda b: (b, 0))] + [_resident_spec()] * 8,
        out_specs=pl.BlockSpec((N, 3 * D), lambda b: (b, 0)),
        compiler_params=cp,
    )(x_flat, prep["w1b"], prep["b1t"], prep["w2b"], prep["b2t"],
      prep["w3f"], prep["b3"], prep["wqkv"], prep["bqkv"])

    # Train-mode BatchNorm statistics for q/k/v (biased var over all B*N rows).
    # Decoupling these tiny per-channel reductions is what lets the grid axes stay
    # "parallel" (no cross-batch coupling inside the kernels).
    qkv_mean = jnp.mean(qkv_pre, axis=0, keepdims=True)
    qkv_var = jnp.mean(jnp.square(qkv_pre - qkv_mean), axis=0, keepdims=True)
    qkv_rstd = jax.lax.rsqrt(qkv_var + BN_EPS)

    # ---- pass 2: multi-head graph attention + output projection -----------
    attn_fn = functools.partial(attention_kernel, N=N, D=D, H=H, scale=ATTN_SCALE)
    z_pre = pl.pallas_call(
        attn_fn,
        out_shape=jax.ShapeDtypeStruct((B * N, D), F32),
        grid=(B,),
        in_specs=[pl.BlockSpec((N, 3 * D), lambda b: (b, 0))] + [_resident_spec()] * 5,
        out_specs=pl.BlockSpec((N, D), lambda b: (b, 0)),
        compiler_params=cp,
    )(qkv_pre, qkv_mean, qkv_rstd, prep["head_mask"], prep["wo"], prep["bo"])

    z_mean = jnp.mean(z_pre, axis=0, keepdims=True)
    z_var = jnp.mean(jnp.square(z_pre - z_mean), axis=0, keepdims=True)
    z_rstd = jax.lax.rsqrt(z_var + BN_EPS)

    pmask = jnp.where(pre_graph > 0, 1.0, 0.0).astype(F32)

    # ---- pass 3: masked outer product + normalizations ---------------------
    out_slab = pl.pallas_call(
        graph_kernel,
        out_shape=jax.ShapeDtypeStruct((B * N, N), F32),
        grid=(B,),
        in_specs=[pl.BlockSpec((N, D), lambda b: (b, 0))] + [_resident_spec()] * 4,
        out_specs=pl.BlockSpec((N, N), lambda b: (b, 0)),
        compiler_params=cp,
    )(z_pre, z_mean, z_rstd, pre_graph, pmask)

    return out_slab.reshape(B, N, N)


# ---------------------------------------------------------------------------
# One-time weight preprocessing (hoisted out of the per-call wrapper).
# ---------------------------------------------------------------------------
def prepare_params(params, n_hist):
    T = n_hist
    C, D = params["w1"].shape
    H = NUM_HEADS
    K = D // H
    eye_t = jnp.eye(T, dtype=F32)

    # head_mask[h, d] = 1 iff feature d belongs to head h (contiguous size-K chunk).
    d_idx = jnp.arange(D, dtype=jnp.int32)[None, :]
    lo = (jnp.arange(H, dtype=jnp.int32) * K)[:, None]
    head_mask = ((d_idx >= lo) & (d_idx < lo + K)).astype(F32)         # (H, D)

    return {
        # `nodes` conv stack: two 1x1 convs as block-diagonal matmuls over T,
        # the (1, n_hist) conv as a single (T*D, D) matmul.
        "w1b": jnp.kron(eye_t, params["w1"]),        # (T*C, T*D)
        "b1t": jnp.tile(params["b1"], (1, T)),       # (1, T*D)
        "w2b": jnp.kron(eye_t, params["w2"]),        # (T*D, T*D)
        "b2t": jnp.tile(params["b2"], (1, T)),       # (1, T*D)
        "w3f": params["w3"].reshape(T * D, D),       # (T*D, D), row index t*D + ci
        "b3": params["b3"],                          # (1, D)
        # Fused q/k/v projection (one wide matmul) + output projection.
        "wqkv": jnp.concatenate([params["wq"], params["wk"], params["wv"]], axis=1),  # (D, 3D)
        "bqkv": jnp.concatenate([params["bq"], params["bk"], params["bv"]], axis=1),  # (1, 3D)
        "wo": params["wo"],                          # (D, D)
        "bo": params["bo"],                          # (1, D)
        "head_mask": head_mask,                      # (H, D)
    }


# ---------------------------------------------------------------------------
# Deterministic parameter init (xavier-style weights, zero biases).
# ---------------------------------------------------------------------------
def init_params(key, n_in, node_dim, n_hist):
    ks = jax.random.split(key, 8)

    def xavier(k, shape, fan_in, fan_out):
        bound = math.sqrt(6.0 / (fan_in + fan_out))
        return jax.random.uniform(k, shape, F32, -bound, bound)

    D, C, T = node_dim, n_in, n_hist
    return {
        # `nodes` conv stack
        "w1": xavier(ks[0], (C, D), C, D),
        "b1": jnp.zeros((1, D), F32),
        "w2": xavier(ks[1], (D, D), D, D),
        "b2": jnp.zeros((1, D), F32),
        "w3": xavier(ks[2], (T, D, D), D * T, D),    # w3[t, ci, co] == torch_w3[co, ci, 0, t]
        "b3": jnp.zeros((1, D), F32),
        # GraphAttention FC_q / FC_k / FC_v / FC
        "wq": xavier(ks[3], (D, D), D, D),
        "bq": jnp.zeros((1, D), F32),
        "wk": xavier(ks[4], (D, D), D, D),
        "bk": jnp.zeros((1, D), F32),
        "wv": xavier(ks[5], (D, D), D, D),
        "bv": jnp.zeros((1, D), F32),
        "wo": xavier(ks[6], (D, D), D, D),
        "bo": jnp.zeros((1, D), F32),
    }


if __name__ == "__main__":
    # node_dim must be divisible by 8 (8 heads of size node_dim // 8).
    B, T, N, C, node_dim = 4, 8, 16, 2, 32   # n_hist=8, n_in=2, num_nodes=16

    key = jax.random.PRNGKey(0)
    k_x, k_g, k_p = jax.random.split(key, 3)

    inputs = jax.random.normal(k_x, (B, T, N, C), F32)                   # [B, T, N, C]
    pre_graph = jax.random.uniform(k_g, (N, N), F32, -0.5, 1.0)          # [N, N]
    params = init_params(k_p, n_in=C, node_dim=node_dim, n_hist=T)
    prep = prepare_params(params, n_hist=T)     # one-time weight prep (kron/tile/concat)

    fwd = jax.jit(adaptive_graph_learner)
    out = fwd(inputs, pre_graph, prep)                                   # [B, N, N]
    jax.block_until_ready(out)
    assert out.shape == (B, N, N)
    assert bool(jnp.all(jnp.isfinite(out)))
    print("KERNEL_OK")
</pallas_src>

<mosaic_0001>
module attributes {stable_mosaic.version = 11 : i64} {
  func.func @nodes_qkv_kernel(%arg0: i32, %arg1: memref<16x16xf32, #tpu.memory_space<vmem>>, %arg2: memref<16x256xf32, #tpu.memory_space<vmem>>, %arg3: memref<1x256xf32, #tpu.memory_space<vmem>>, %arg4: memref<256x256xf32, #tpu.memory_space<vmem>>, %arg5: memref<1x256xf32, #tpu.memory_space<vmem>>, %arg6: memref<256x32xf32, #tpu.memory_space<vmem>>, %arg7: memref<1x32xf32, #tpu.memory_space<vmem>>, %arg8: memref<32x96xf32, #tpu.memory_space<vmem>>, %arg9: memref<1x96xf32, #tpu.memory_space<vmem>>, %arg10: memref<16x96xf32, #tpu.memory_space<vmem>>) attributes {dimension_semantics = [#tpu.dimension_semantics<parallel>], iteration_bounds = array<i64: 4>, scalar_prefetch = 0 : i64, scratch_operands = 0 : i64, tpu.core_type = #tpu.core_type<tc>, window_params = [{transform_indices = @transform_0, window_bounds = array<i64: 16, 16>}, {pipeline_mode = #tpu.pipeline_mode<synchronous>, transform_indices = @transform_1, window_bounds = array<i64: 16, 256>}, {pipeline_mode = #tpu.pipeline_mode<synchronous>, transform_indices = @transform_2, window_bounds = array<i64: 1, 256>}, {pipeline_mode = #tpu.pipeline_mode<synchronous>, transform_indices = @transform_3, window_bounds = array<i64: 256, 256>}, {pipeline_mode = #tpu.pipeline_mode<synchronous>, transform_indices = @transform_4, window_bounds = array<i64: 1, 256>}, {pipeline_mode = #tpu.pipeline_mode<synchronous>, transform_indices = @transform_5, window_bounds = array<i64: 256, 32>}, {pipeline_mode = #tpu.pipeline_mode<synchronous>, transform_indices = @transform_6, window_bounds = array<i64: 1, 32>}, {pipeline_mode = #tpu.pipeline_mode<synchronous>, transform_indices = @transform_7, window_bounds = array<i64: 32, 96>}, {pipeline_mode = #tpu.pipeline_mode<synchronous>, transform_indices = @transform_8, window_bounds = array<i64: 1, 96>}, {transform_indices = @transform_9, window_bounds = array<i64: 16, 96>}]} {
    %c0 = arith.constant 0 : index
    %c0_0 = arith.constant 0 : index
    %0 = vector.load %arg1[%c0, %c0_0] : memref<16x16xf32, #tpu.memory_space<vmem>>, vector<16x16xf32>
    %c0_1 = arith.constant 0 : index
    %c0_2 = arith.constant 0 : index
    %1 = vector.load %arg2[%c0_1, %c0_2] : memref<16x256xf32, #tpu.memory_space<vmem>>, vector<16x256xf32>
    %cst = arith.constant dense<0.000000e+00> : vector<16x256xf32>
    %2 = tpu.matmul %0, %1, %cst {dimension_numbers = #tpu.dot_dimension_numbers<[1], [0], [0], [1], [0, 0, 1, 1], [], []>} : vector<16x16xf32>, vector<16x256xf32>, vector<16x256xf32> -> vector<16x256xf32>
    %c0_3 = arith.constant 0 : index
    %c0_4 = arith.constant 0 : index
    %3 = vector.load %arg3[%c0_3, %c0_4] : memref<1x256xf32, #tpu.memory_space<vmem>>, vector<1x256xf32>
    %4 = vector.broadcast %3 : vector<1x256xf32> to vector<16x256xf32>
    %5 = arith.addf %2, %4 : vector<16x256xf32>
    %cst_5 = arith.constant 0.000000e+00 : f32
    %6 = vector.broadcast %cst_5 : f32 to vector<16x256xf32>
    %7 = arith.maximumf %5, %6 : vector<16x256xf32>
    %c0_6 = arith.constant 0 : index
    %c0_7 = arith.constant 0 : index
    %8 = vector.load %arg4[%c0_6, %c0_7] : memref<256x256xf32, #tpu.memory_space<vmem>>, vector<256x256xf32>
    %cst_8 = arith.constant dense<0.000000e+00> : vector<16x256xf32>
    %9 = tpu.matmul %7, %8, %cst_8 {dimension_numbers = #tpu.dot_dimension_numbers<[1], [0], [0], [1], [0, 0, 1, 1], [], []>} : vector<16x256xf32>, vector<256x256xf32>, vector<16x256xf32> -> vector<16x256xf32>
    %c0_9 = arith.constant 0 : index
    %c0_10 = arith.constant 0 : index
    %10 = vector.load %arg5[%c0_9, %c0_10] : memref<1x256xf32, #tpu.memory_space<vmem>>, vector<1x256xf32>
    %11 = vector.broadcast %10 : vector<1x256xf32> to vector<16x256xf32>
    %12 = arith.addf %9, %11 : vector<16x256xf32>
    %cst_11 = arith.constant 0.000000e+00 : f32
    %13 = vector.broadcast %cst_11 : f32 to vector<16x256xf32>
    %14 = arith.maximumf %12, %13 : vector<16x256xf32>
    %c0_12 = arith.constant 0 : index
    %c0_13 = arith.constant 0 : index
    %15 = vector.load %arg6[%c0_12, %c0_13] : memref<256x32xf32, #tpu.memory_space<vmem>>, vector<256x32xf32>
    %cst_14 = arith.constant dense<0.000000e+00> : vector<16x32xf32>
    %16 = tpu.matmul %14, %15, %cst_14 {dimension_numbers = #tpu.dot_dimension_numbers<[1], [0], [0], [1], [0, 0, 1, 1], [], []>} : vector<16x256xf32>, vector<256x32xf32>, vector<16x32xf32> -> vector<16x32xf32>
    %c0_15 = arith.constant 0 : index
    %c0_16 = arith.constant 0 : index
    %17 = vector.load %arg7[%c0_15, %c0_16] : memref<1x32xf32, #tpu.memory_space<vmem>>, vector<1x32xf32>
    %18 = vector.broadcast %17 : vector<1x32xf32> to vector<16x32xf32>
    %19 = arith.addf %16, %18 : vector<16x32xf32>
    %c0_17 = arith.constant 0 : index
    %c0_18 = arith.constant 0 : index
    %20 = vector.load %arg8[%c0_17, %c0_18] : memref<32x96xf32, #tpu.memory_space<vmem>>, vector<32x96xf32>
    %cst_19 = arith.constant dense<0.000000e+00> : vector<16x96xf32>
    %21 = tpu.matmul %19, %20, %cst_19 {dimension_numbers = #tpu.dot_dimension_numbers<[1], [0], [0], [1], [0, 0, 1, 1], [], []>} : vector<16x32xf32>, vector<32x96xf32>, vector<16x96xf32> -> vector<16x96xf32>
    %c0_20 = arith.constant 0 : index
    %c0_21 = arith.constant 0 : index
    %22 = vector.load %arg9[%c0_20, %c0_21] : memref<1x96xf32, #tpu.memory_space<vmem>>, vector<1x96xf32>
    %23 = vector.broadcast %22 : vector<1x96xf32> to vector<16x96xf32>
    %24 = arith.addf %21, %23 : vector<16x96xf32>
    %c0_22 = arith.constant 0 : index
    %c0_23 = arith.constant 0 : index
    %25 = vector.load %arg10[%c0_22, %c0_23] : memref<16x96xf32, #tpu.memory_space<vmem>>, vector<16x96xf32>
    tpu.vector_store %arg10[%c0_22, %c0_23], %24 {strides = array<i32>} : memref<16x96xf32, #tpu.memory_space<vmem>>, vector<16x96xf32>,
    return
  }
  func.func @transform_0(%arg0: i32) -> (i32, i32) {
    %c0_i32 = arith.constant 0 : i32
    %c0_i32_0 = arith.constant 0 : i32
    return %arg0, %c0_i32 : i32, i32
  }
  func.func @transform_1(%arg0: i32) -> (i32, i32) {
    %c0_i32 = arith.constant 0 : i32
    %c0_i32_0 = arith.constant 0 : i32
    %c0_i32_1 = arith.constant 0 : i32
    return %c0_i32, %c0_i32_0 : i32, i32
  }
  func.func @transform_2(%arg0: i32) -> (i32, i32) {
    %c0_i32 = arith.constant 0 : i32
    %c0_i32_0 = arith.constant 0 : i32
    %c0_i32_1 = arith.constant 0 : i32
    return %c0_i32, %c0_i32_0 : i32, i32
  }
  func.func @transform_3(%arg0: i32) -> (i32, i32) {
    %c0_i32 = arith.constant 0 : i32
    %c0_i32_0 = arith.constant 0 : i32
    %c0_i32_1 = arith.constant 0 : i32
    return %c0_i32, %c0_i32_0 : i32, i32
  }
  func.func @transform_4(%arg0: i32) -> (i32, i32) {
    %c0_i32 = arith.constant 0 : i32
    %c0_i32_0 = arith.constant 0 : i32
    %c0_i32_1 = arith.constant 0 : i32
    return %c0_i32, %c0_i32_0 : i32, i32
  }
  func.func @transform_5(%arg0: i32) -> (i32, i32) {
    %c0_i32 = arith.constant 0 : i32
    %c0_i32_0 = arith.constant 0 : i32
    %c0_i32_1 = arith.constant 0 : i32
    return %c0_i32, %c0_i32_0 : i32, i32
  }
  func.func @transform_6(%arg0: i32) -> (i32, i32) {
    %c0_i32 = arith.constant 0 : i32
    %c0_i32_0 = arith.constant 0 : i32
    %c0_i32_1 = arith.constant 0 : i32
    return %c0_i32, %c0_i32_0 : i32, i32
  }
  func.func @transform_7(%arg0: i32) -> (i32, i32) {
    %c0_i32 = arith.constant 0 : i32
    %c0_i32_0 = arith.constant 0 : i32
    %c0_i32_1 = arith.constant 0 : i32
    return %c0_i32, %c0_i32_0 : i32, i32
  }
  func.func @transform_8(%arg0: i32) -> (i32, i32) {
    %c0_i32 = arith.constant 0 : i32
    %c0_i32_0 = arith.constant 0 : i32
    %c0_i32_1 = arith.constant 0 : i32
    return %c0_i32, %c0_i32_0 : i32, i32
  }
  func.func @transform_9(%arg0: i32) -> (i32, i32) {
    %c0_i32 = arith.constant 0 : i32
    %c0_i32_0 = arith.constant 0 : i32
    return %arg0, %c0_i32 : i32, i32
  }
}

module attributes {stable_mosaic.version = 11 : i64} {
  func.func @attention_kernel(%arg0: i32, %arg1: memref<16x96xf32, #tpu.memory_space<vmem>>, %arg2: memref<1x96xf32, #tpu.memory_space<vmem>>, %arg3: memref<1x96xf32, #tpu.memory_space<vmem>>, %arg4: memref<8x32xf32, #tpu.memory_space<vmem>>, %arg5: memref<32x32xf32, #tpu.memory_space<vmem>>, %arg6: memref<1x32xf32, #tpu.memory_space<vmem>>, %arg7: memref<16x32xf32, #tpu.memory_space<vmem>>) attributes {dimension_semantics = [#tpu.dimension_semantics<parallel>], iteration_bounds = array<i64: 4>, scalar_prefetch = 0 : i64, scratch_operands = 0 : i64, tpu.core_type = #tpu.core_type<tc>, window_params = [{transform_indices = @transform_0, window_bounds = array<i64: 16, 96>}, {pipeline_mode = #tpu.pipeline_mode<synchronous>, transform_indices = @transform_1, window_bounds = array<i64: 1, 96>}, {pipeline_mode = #tpu.pipeline_mode<synchronous>, transform_indices = @transform_2, window_bounds = array<i64: 1, 96>}, {pipeline_mode = #tpu.pipeline_mode<synchronous>, transform_indices = @transform_3, window_bounds = array<i64: 8, 32>}, {pipeline_mode = #tpu.pipeline_mode<synchronous>, transform_indices = @transform_4, window_bounds = array<i64: 32, 32>}, {pipeline_mode = #tpu.pipeline_mode<synchronous>, transform_indices = @transform_5, window_bounds = array<i64: 1, 32>}, {transform_indices = @transform_6, window_bounds = array<i64: 16, 32>}]} {
    %c0 = arith.constant 0 : index
    %c0_0 = arith.constant 0 : index
    %0 = vector.load %arg1[%c0, %c0_0] : memref<16x96xf32, #tpu.memory_space<vmem>>, vector<16x96xf32>
    %c0_1 = arith.constant 0 : index
    %c0_2 = arith.constant 0 : index
    %1 = vector.load %arg2[%c0_1, %c0_2] : memref<1x96xf32, #tpu.memory_space<vmem>>, vector<1x96xf32>
    %2 = vector.broadcast %1 : vector<1x96xf32> to vector<16x96xf32>
    %3 = arith.subf %0, %2 : vector<16x96xf32>
    %c0_3 = arith.constant 0 : index
    %c0_4 = arith.constant 0 : index
    %4 = vector.load %arg3[%c0_3, %c0_4] : memref<1x96xf32, #tpu.memory_space<vmem>>, vector<1x96xf32>
    %5 = vector.broadcast %4 : vector<1x96xf32> to vector<16x96xf32>
    %6 = arith.mulf %3, %5 : vector<16x96xf32>
    %cst = arith.constant 0.000000e+00 : f32
    %7 = vector.broadcast %cst : f32 to vector<16x96xf32>
    %8 = arith.maximumf %6, %7 : vector<16x96xf32>
    %9 = vector.extract_strided_slice %8 {offsets = [0, 0], sizes = [16, 32], strides = [1, 1]} : vector<16x96xf32> to vector<16x32xf32>
    %10 = vector.extract_strided_slice %8 {offsets = [0, 32], sizes = [16, 32], strides = [1, 1]} : vector<16x96xf32> to vector<16x32xf32>
    %11 = vector.extract_strided_slice %8 {offsets = [0, 64], sizes = [16, 32], strides = [1, 1]} : vector<16x96xf32> to vector<16x32xf32>
    %c0_5 = arith.constant 0 : index
    %c0_6 = arith.constant 0 : index
    %12 = vector.load %arg4[%c0_5, %c0_6] : memref<8x32xf32, #tpu.memory_space<vmem>>, vector<8x32xf32>
    %13 = vector.shape_cast %9 : vector<16x32xf32> to vector<1x16x32xf32>
    %14 = vector.shape_cast %12 : vector<8x32xf32> to vector<8x1x32xf32>
    %15 = vector.broadcast %13 : vector<1x16x32xf32> to vector<8x16x32xf32>
    %16 = vector.broadcast %14 : vector<8x1x32xf32> to vector<8x16x32xf32>
    %17 = arith.mulf %15, %16 : vector<8x16x32xf32>
    %18 = vector.shape_cast %17 : vector<8x16x32xf32> to vector<128x32xf32>
    %cst_7 = arith.constant dense<0.000000e+00> : vector<128x16xf32>
    %19 = tpu.matmul %18, %10, %cst_7 {dimension_numbers = #tpu.dot_dimension_numbers<[1], [1], [0], [0], [0, 0, 1, 0], [], []>} : vector<128x32xf32>, vector<16x32xf32>, vector<128x16xf32> -> vector<128x16xf32>
    %cst_8 = arith.constant 0.353553385 : f32
    %20 = vector.broadcast %cst_8 : f32 to vector<128x16xf32>
    %21 = arith.mulf %19, %20 : vector<128x16xf32>
    %cst_9 = arith.constant dense<0xFF800000> : vector<128xf32>
    %22 = vector.multi_reduction <maximumf>, %21, %cst_9 [1] : vector<128x16xf32> to vector<128xf32>
    %23 = vector.shape_cast %22 : vector<128xf32> to vector<128x1xf32>
    %24 = vector.broadcast %23 : vector<128x1xf32> to vector<128x16xf32>
    %25 = arith.subf %21, %24 : vector<128x16xf32>
    %26 = math.exp %25 : vector<128x16xf32>
    %cst_10 = arith.constant dense<0.000000e+00> : vector<128xf32>
    %27 = vector.multi_reduction <add>, %26, %cst_10 [1] : vector<128x16xf32> to vector<128xf32>
    %28 = vector.shape_cast %27 : vector<128xf32> to vector<128x1xf32>
    %cst_11 = arith.constant 1.000000e+00 : f32
    %29 = vector.broadcast %cst_11 : f32 to vector<128x1xf32>
    %30 = arith.divf %29, %28 : vector<128x1xf32>
    %31 = vector.broadcast %30 : vector<128x1xf32> to vector<128x16xf32>
    %32 = arith.mulf %26, %31 : vector<128x16xf32>
    %cst_12 = arith.constant dense<0.000000e+00> : vector<128x32xf32>
    %33 = tpu.matmul %32, %11, %cst_12 {dimension_numbers = #tpu.dot_dimension_numbers<[1], [0], [0], [1], [0, 0, 1, 1], [], []>} : vector<128x16xf32>, vector<16x32xf32>, vector<128x32xf32> -> vector<128x32xf32>
    %34 = vector.shape_cast %33 : vector<128x32xf32> to vector<8x16x32xf32>
    %35 = vector.shape_cast %12 : vector<8x32xf32> to vector<8x1x32xf32>
    %36 = vector.broadcast %35 : vector<8x1x32xf32> to vector<8x16x32xf32>
    %37 = arith.mulf %34, %36 : vector<8x16x32xf32>
    %cst_13 = arith.constant dense<0.000000e+00> : vector<16x32xf32>
    %38 = vector.multi_reduction <add>, %37, %cst_13 [0] : vector<8x16x32xf32> to vector<16x32xf32>
    %c0_14 = arith.constant 0 : index
    %c0_15 = arith.constant 0 : index
    %39 = vector.load %arg5[%c0_14, %c0_15] : memref<32x32xf32, #tpu.memory_space<vmem>>, vector<32x32xf32>
    %cst_16 = arith.constant dense<0.000000e+00> : vector<16x32xf32>
    %40 = tpu.matmul %38, %39, %cst_16 {dimension_numbers = #tpu.dot_dimension_numbers<[1], [0], [0], [1], [0, 0, 1, 1], [], []>} : vector<16x32xf32>, vector<32x32xf32>, vector<16x32xf32> -> vector<16x32xf32>
    %c0_17 = arith.constant 0 : index
    %c0_18 = arith.constant 0 : index
    %41 = vector.load %arg6[%c0_17, %c0_18] : memref<1x32xf32, #tpu.memory_space<vmem>>, vector<1x32xf32>
    %42 = vector.broadcast %41 : vector<1x32xf32> to vector<16x32xf32>
    %43 = arith.addf %40, %42 : vector<16x32xf32>
    %c0_19 = arith.constant 0 : index
    %c0_20 = arith.constant 0 : index
    %44 = vector.load %arg7[%c0_19, %c0_20] : memref<16x32xf32, #tpu.memory_space<vmem>>, vector<16x32xf32>
    tpu.vector_store %arg7[%c0_19, %c0_20], %43 {strides = array<i32>} : memref<16x32xf32, #tpu.memory_space<vmem>>, vector<16x32xf32>,
    return
  }
  func.func @transform_0(%arg0: i32) -> (i32, i32) {
    %c0_i32 = arith.constant 0 : i32
    %c0_i32_0 = arith.constant 0 : i32
    return %arg0, %c0_i32 : i32, i32
  }
  func.func @transform_1(%arg0: i32) -> (i32, i32) {
    %c0_i32 = arith.constant 0 : i32
    %c0_i32_0 = arith.constant 0 : i32
    %c0_i32_1 = arith.constant 0 : i32
    return %c0_i32, %c0_i32_0 : i32, i32
  }
  func.func @transform_2(%arg0: i32) -> (i32, i32) {
    %c0_i32 = arith.constant 0 : i32
    %c0_i32_0 = arith.constant 0 : i32
    %c0_i32_1 = arith.constant 0 : i32
    return %c0_i32, %c0_i32_0 : i32, i32
  }
  func.func @transform_3(%arg0: i32) -> (i32, i32) {
    %c0_i32 = arith.constant 0 : i32
    %c0_i32_0 = arith.constant 0 : i32
    %c0_i32_1 = arith.constant 0 : i32
    return %c0_i32, %c0_i32_0 : i32, i32
  }
  func.func @transform_4(%arg0: i32) -> (i32, i32) {
    %c0_i32 = arith.constant 0 : i32
    %c0_i32_0 = arith.constant 0 : i32
    %c0_i32_1 = arith.constant 0 : i32
    return %c0_i32, %c0_i32_0 : i32, i32
  }
  func.func @transform_5(%arg0: i32) -> (i32, i32) {
    %c0_i32 = arith.constant 0 : i32
    %c0_i32_0 = arith.constant 0 : i32
    %c0_i32_1 = arith.constant 0 : i32
    return %c0_i32, %c0_i32_0 : i32, i32
  }
  func.func @transform_6(%arg0: i32) -> (i32, i32) {
    %c0_i32 = arith.constant 0 : i32
    %c0_i32_0 = arith.constant 0 : i32
    return %arg0, %c0_i32 : i32, i32
  }
}

module attributes {stable_mosaic.version = 11 : i64} {
  func.func @graph_kernel(%arg0: i32, %arg1: memref<16x32xf32, #tpu.memory_space<vmem>>, %arg2: memref<1x32xf32, #tpu.memory_space<vmem>>, %arg3: memref<1x32xf32, #tpu.memory_space<vmem>>, %arg4: memref<16x16xf32, #tpu.memory_space<vmem>>, %arg5: memref<16x16xf32, #tpu.memory_space<vmem>>, %arg6: memref<16x16xf32, #tpu.memory_space<vmem>>) attributes {dimension_semantics = [#tpu.dimension_semantics<parallel>], iteration_bounds = array<i64: 4>, scalar_prefetch = 0 : i64, scratch_operands = 0 : i64, tpu.core_type = #tpu.core_type<tc>, window_params = [{transform_indices = @transform_0, window_bounds = array<i64: 16, 32>}, {pipeline_mode = #tpu.pipeline_mode<synchronous>, transform_indices = @transform_1, window_bounds = array<i64: 1, 32>}, {pipeline_mode = #tpu.pipeline_mode<synchronous>, transform_indices = @transform_2, window_bounds = array<i64: 1, 32>}, {pipeline_mode = #tpu.pipeline_mode<synchronous>, transform_indices = @transform_3, window_bounds = array<i64: 16, 16>}, {pipeline_mode = #tpu.pipeline_mode<synchronous>, transform_indices = @transform_4, window_bounds = array<i64: 16, 16>}, {transform_indices = @transform_5, window_bounds = array<i64: 16, 16>}]} {
    %c0 = arith.constant 0 : index
    %c0_0 = arith.constant 0 : index
    %0 = vector.load %arg1[%c0, %c0_0] : memref<16x32xf32, #tpu.memory_space<vmem>>, vector<16x32xf32>
    %c0_1 = arith.constant 0 : index
    %c0_2 = arith.constant 0 : index
    %1 = vector.load %arg2[%c0_1, %c0_2] : memref<1x32xf32, #tpu.memory_space<vmem>>, vector<1x32xf32>
    %2 = vector.broadcast %1 : vector<1x32xf32> to vector<16x32xf32>
    %3 = arith.subf %0, %2 : vector<16x32xf32>
    %c0_3 = arith.constant 0 : index
    %c0_4 = arith.constant 0 : index
    %4 = vector.load %arg3[%c0_3, %c0_4] : memref<1x32xf32, #tpu.memory_space<vmem>>, vector<1x32xf32>
    %5 = vector.broadcast %4 : vector<1x32xf32> to vector<16x32xf32>
    %6 = arith.mulf %3, %5 : vector<16x32xf32>
    %cst = arith.constant 0.000000e+00 : f32
    %7 = vector.broadcast %cst : f32 to vector<16x32xf32>
    %8 = arith.maximumf %6, %7 : vector<16x32xf32>
    %cst_5 = arith.constant dense<0.000000e+00> : vector<16x16xf32>
    %9 = tpu.matmul %8, %8, %cst_5 {dimension_numbers = #tpu.dot_dimension_numbers<[1], [1], [0], [0], [0, 0, 1, 0], [], []>} : vector<16x32xf32>, vector<16x32xf32>, vector<16x16xf32> -> vector<16x16xf32>
    %c0_6 = arith.constant 0 : index
    %c0_7 = arith.constant 0 : index
    %10 = vector.load %arg5[%c0_6, %c0_7] : memref<16x16xf32, #tpu.memory_space<vmem>>, vector<16x16xf32>
    %11 = arith.mulf %9, %10 : vector<16x16xf32>
    %12 = arith.mulf %11, %11 : vector<16x16xf32>
    %cst_8 = arith.constant dense<0.000000e+00> : vector<16xf32>
    %13 = vector.multi_reduction <add>, %12, %cst_8 [1] : vector<16x16xf32> to vector<16xf32>
    %14 = vector.shape_cast %13 : vector<16xf32> to vector<16x1xf32>
    %15 = math.sqrt %14 : vector<16x1xf32>
    %cst_9 = arith.constant 9.99999996E-13 : f32
    %16 = vector.broadcast %cst_9 : f32 to vector<16x1xf32>
    %17 = arith.maximumf %15, %16 : vector<16x1xf32>
    %cst_10 = arith.constant 1.000000e+00 : f32
    %18 = vector.broadcast %cst_10 : f32 to vector<16x1xf32>
    %19 = arith.divf %18, %17 : vector<16x1xf32>
    %20 = vector.broadcast %19 : vector<16x1xf32> to vector<16x16xf32>
    %21 = arith.mulf %11, %20 : vector<16x16xf32>
    %c0_11 = arith.constant 0 : index
    %c0_12 = arith.constant 0 : index
    %22 = vector.load %arg4[%c0_11, %c0_12] : memref<16x16xf32, #tpu.memory_space<vmem>>, vector<16x16xf32>
    %23 = arith.addf %22, %21 : vector<16x16xf32>
    %cst_13 = arith.constant 0.000000e+00 : f32
    %24 = vector.broadcast %cst_13 : f32 to vector<16x16xf32>
    %25 = arith.maximumf %23, %24 : vector<16x16xf32>
    %26 = arith.mulf %25, %25 : vector<16x16xf32>
    %cst_14 = arith.constant dense<0.000000e+00> : vector<16xf32>
    %27 = vector.multi_reduction <add>, %26, %cst_14 [1] : vector<16x16xf32> to vector<16xf32>
    %28 = vector.shape_cast %27 : vector<16xf32> to vector<16x1xf32>
    %29 = math.sqrt %28 : vector<16x1xf32>
    %cst_15 = arith.constant 9.99999996E-13 : f32
    %30 = vector.broadcast %cst_15 : f32 to vector<16x1xf32>
    %31 = arith.maximumf %29, %30 : vector<16x1xf32>
    %cst_16 = arith.constant 1.000000e+00 : f32
    %32 = vector.broadcast %cst_16 : f32 to vector<16x1xf32>
    %33 = arith.divf %32, %31 : vector<16x1xf32>
    %34 = vector.broadcast %33 : vector<16x1xf32> to vector<16x16xf32>
    %35 = arith.mulf %25, %34 : vector<16x16xf32>
    %c0_17 = arith.constant 0 : index
    %c0_18 = arith.constant 0 : index
    %36 = vector.load %arg6[%c0_17, %c0_18] : memref<16x16xf32, #tpu.memory_space<vmem>>, vector<16x16xf32>
    tpu.vector_store %arg6[%c0_17, %c0_18], %35 {strides = array<i32>} : memref<16x16xf32, #tpu.memory_space<vmem>>, vector<16x16xf32>,
    return
  }
  func.func @transform_0(%arg0: i32) -> (i32, i32) {
    %c0_i32 = arith.constant 0 : i32
    %c0_i32_0 = arith.constant 0 : i32
    return %arg0, %c0_i32 : i32, i32
  }
  func.func @transform_1(%arg0: i32) -> (i32, i32) {
    %c0_i32 = arith.constant 0 : i32
    %c0_i32_0 = arith.constant 0 : i32
    %c0_i32_1 = arith.constant 0 : i32
    return %c0_i32, %c0_i32_0 : i32, i32
  }
  func.func @transform_2(%arg0: i32) -> (i32, i32) {
    %c0_i32 = arith.constant 0 : i32
    %c0_i32_0 = arith.constant 0 : i32
    %c0_i32_1 = arith.constant 0 : i32
    return %c0_i32, %c0_i32_0 : i32, i32
  }
  func.func @transform_3(%arg0: i32) -> (i32, i32) {
    %c0_i32 = arith.constant 0 : i32
    %c0_i32_0 = arith.constant 0 : i32
    %c0_i32_1 = arith.constant 0 : i32
    return %c0_i32, %c0_i32_0 : i32, i32
  }
  func.func @transform_4(%arg0: i32) -> (i32, i32) {
    %c0_i32 = arith.constant 0 : i32
    %c0_i32_0 = arith.constant 0 : i32
    %c0_i32_1 = arith.constant 0 : i32
    return %c0_i32, %c0_i32_0 : i32, i32
  }
  func.func @transform_5(%arg0: i32) -> (i32, i32) {
    %c0_i32 = arith.constant 0 : i32
    %c0_i32_0 = arith.constant 0 : i32
    return %arg0, %c0_i32 : i32, i32
  }
}

</mosaic_0001>

<llo_original>
// kernel: adaptive_graph_learner.5
$region0: #{adaptive_graph_learner.5}
  #allocation0 [shape = 'u32[]', space=smem, size = 0x4, offset = 0x4, fixed_abs, tag = 'smem constant byte address 0x4 - core index']
  #allocation1 [shape = 'u32[144,128]{1,0:T(1,128)}', space=vmem, size = 0x12000, scoped, tag = 'internal scratch']
  %s0 = inlined_call_operand.vmem [shape: f32[64,32], index: 0, kind: input, shape index: {}]
  %s1 = inlined_call_operand.vmem [shape: f32[1,32], index: 1, kind: input, shape index: {}]
  %s2 = inlined_call_operand.vmem [shape: f32[1,32], index: 2, kind: input, shape index: {}]
  %s3 = inlined_call_operand.vmem [shape: f32[16,16], index: 3, kind: input, shape index: {}]
  %s4 = inlined_call_operand.vmem [shape: f32[16,16], index: 4, kind: input, shape index: {}]
  %s5 = inlined_call_operand.hbm [shape: f32[64,16], index: 5, kind: output, shape index: {}]
  %s6 = sld [smem:[#allocation0]]
  $region53: #{adaptive_graph_learner.5} parent=0
    _
  %s8 = ssub.s32 1, %s6
  %s9 = scalar_select 0, %s8, %s6
  $region1: #{adaptive_graph_learner.5} parent=0
    #allocation2 [shape = 'u8[16384]{0}', space=vmem, size = 0x4000, scoped, tag = 'output window, operand 0']
    #allocation3 [shape = 's32[2]{0}', space=sflag, size = 0x8, scoped, tag = 'scoped memory for adaptive_graph_learner.5']
    %10 = vsyncpa [#allocation3], 0
    %s11 = scalar_lea.sflag [#allocation3], 1
    %12 = vsyncpa %s11, 0
    loop: start=0, step=1, limit=6
    $region2: #{adaptive_graph_learner.5} parent=1 // loop_pre_header
      _
    $region3: #{adaptive_graph_learner.5} parent=1 // loop_header
      %s14 = sphi 0, %s18
      %p15 = scmp.ge.s32.totalorder %s14, 6
      %s24 = sphi 0, %s26
      %s27 = sphi 0, %s24
      %s28 = sphi 0, %s27
      %s44 = sphi 0, %s28
      %s48 = sphi 0, %s48
      %s50 = sphi 0, %s48
      %s51 = sphi 0, %s50
      %s65 = sphi 0, %s51
      %s69 = sphi 0, %s69
      %s71 = sphi 0, %s69
      %s72 = sphi 0, %s71
      %s86 = sphi 0, %s72
      %s90 = sphi 0, %s90
      %s92 = sphi 0, %s90
      %s93 = sphi 0, %s92
      %s107 = sphi 0, %s93
      %s111 = sphi 0, %s111
      %s113 = sphi 0, %s111
      %s114 = sphi 0, %s113
      %s128 = sphi 0, %s114
      %s134 = sphi 0, %s136
      %s137 = sphi 0, %s134
      %s138 = sphi 0, %s137
      %s154 = sphi 0, %s138
    $region4: #{adaptive_graph_learner.5} parent=1 // loop_header_branch
      %17 = sbr.rel (%p15) target = $region8
    $region5: #{adaptive_graph_learner.5} parent=1 // loop_body
      %s19 = ssub.s32 %s14, 1
      %s20 = ssub.s32 %s14, 2
      %s21 = sadd.s32 %s14, 1
      %s22 = ssub.s32 %s14, %s21
      %p23 = scmp.eq.s32.totalorder %s22, 0
      %s25 = sadd.s32 %s24, 1
      %s26 = scalar_select %p23, %s24, %s25
      %p29 = pneg %p23
      %p30 = scmp.eq.s32.totalorder %s14, 3
      %p31 = por %p29, %p30
      %p32 = scmp.ne.s32.totalorder %s24, %s27
      %p33 = scmp.eq.s32.totalorder %s14, 0
      %p34 = por %p32, %p33
      %p35 = scmp.ne.s32.totalorder %s24, %s27
      %p36 = scmp.eq.s32.totalorder %s19, 3
      %p37 = por %p35, %p36
      %p38 = scmp.ne.s32.totalorder %s27, %s28
      %p39 = scmp.eq.s32.totalorder %s19, 0
      %p40 = por %p38, %p39
      %p41 = scmp.ne.s32.totalorder %s27, %s28
      %p42 = scmp.eq.s32.totalorder %s20, 3
      %p43 = por %p41, %p42
      %p45 = scmp.ne.s32.totalorder %s28, %s44
      %p46 = scmp.eq.s32.totalorder %s20, 0
      %p47 = por %p45, %p46
      %s49 = sadd.s32 %s48, 1
      %p52 = scmp.eq.s32.totalorder %s14, 3
      %p53 = scmp.ne.s32.totalorder %s48, %s50
      %p54 = scmp.eq.s32.totalorder %s14, 0
      %p55 = por %p53, %p54
      %p56 = scmp.ne.s32.totalorder %s48, %s50
      %p57 = scmp.eq.s32.totalorder %s19, 3
      %p58 = por %p56, %p57
      %p59 = scmp.ne.s32.totalorder %s50, %s51
      %p60 = scmp.eq.s32.totalorder %s19, 0
      %p61 = por %p59, %p60
      %p62 = scmp.ne.s32.totalorder %s50, %s51
      %p63 = scmp.eq.s32.totalorder %s20, 3
      %p64 = por %p62, %p63
      %p66 = scmp.ne.s32.totalorder %s51, %s65
      %p67 = scmp.eq.s32.totalorder %s20, 0
      %p68 = por %p66, %p67
      %s70 = sadd.s32 %s69, 1
      %p73 = scmp.eq.s32.totalorder %s14, 3
      %p74 = scmp.ne.s32.totalorder %s69, %s71
      %p75 = scmp.eq.s32.totalorder %s14, 0
      %p76 = por %p74, %p75
      %p77 = scmp.ne.s32.totalorder %s69, %s71
      %p78 = scmp.eq.s32.totalorder %s19, 3
      %p79 = por %p77, %p78
      %p80 = scmp.ne.s32.totalorder %s71, %s72
      %p81 = scmp.eq.s32.totalorder %s19, 0
      %p82 = por %p80, %p81
      %p83 = scmp.ne.s32.totalorder %s71, %s72
      %p84 = scmp.eq.s32.totalorder %s20, 3
      %p85 = por %p83, %p84
      %p87 = scmp.ne.s32.totalorder %s72, %s86
      %p88 = scmp.eq.s32.totalorder %s20, 0
      %p89 = por %p87, %p88
      %s91 = sadd.s32 %s90, 1
      %p94 = scmp.eq.s32.totalorder %s14, 3
      %p95 = scmp.ne.s32.totalorder %s90, %s92
      %p96 = scmp.eq.s32.totalorder %s14, 0
      %p97 = por %p95, %p96
      %p98 = scmp.ne.s32.totalorder %s90, %s92
      %p99 = scmp.eq.s32.totalorder %s19, 3
      %p100 = por %p98, %p99
      %p101 = scmp.ne.s32.totalorder %s92, %s93
      %p102 = scmp.eq.s32.totalorder %s19, 0
      %p103 = por %p101, %p102
      %p104 = scmp.ne.s32.totalorder %s92, %s93
      %p105 = scmp.eq.s32.totalorder %s20, 3
      %p106 = por %p104, %p105
      %p108 = scmp.ne.s32.totalorder %s93, %s107
      %p109 = scmp.eq.s32.totalorder %s20, 0
      %p110 = por %p108, %p109
      %s112 = sadd.s32 %s111, 1
      %p115 = scmp.eq.s32.totalorder %s14, 3
      %p116 = scmp.ne.s32.totalorder %s111, %s113
      %p117 = scmp.eq.s32.totalorder %s14, 0
      %p118 = por %p116, %p117
      %p119 = scmp.ne.s32.totalorder %s111, %s113
      %p120 = scmp.eq.s32.totalorder %s19, 3
      %p121 = por %p119, %p120
      %p122 = scmp.ne.s32.totalorder %s113, %s114
      %p123 = scmp.eq.s32.totalorder %s19, 0
      %p124 = por %p122, %p123
      %p125 = scmp.ne.s32.totalorder %s113, %s114
      %p126 = scmp.eq.s32.totalorder %s20, 3
      %p127 = por %p125, %p126
      %p129 = scmp.ne.s32.totalorder %s114, %s128
      %p130 = scmp.eq.s32.totalorder %s20, 0
      %p131 = por %p129, %p130
      %s132 = ssub.s32 %s14, %s21
      %p133 = scmp.eq.s32.totalorder %s132, 0
      %s135 = sadd.s32 %s134, 1
      %s136 = scalar_select %p133, %s134, %s135
      %p139 = pneg %p133
      %p140 = scmp.eq.s32.totalorder %s14, 3
      %p141 = por %p139, %p140
      %p142 = scmp.ne.s32.totalorder %s134, %s137
      %p143 = scmp.eq.s32.totalorder %s14, 0
      %p144 = por %p142, %p143
      %p145 = scmp.ne.s32.totalorder %s134, %s137
      %p146 = scmp.eq.s32.totalorder %s19, 3
      %p147 = por %p145, %p146
      %p148 = scmp.ne.s32.totalorder %s137, %s138
      %p149 = scmp.eq.s32.totalorder %s19, 0
      %p150 = por %p148, %p149
      %p151 = scmp.ne.s32.totalorder %s137, %s138
      %p152 = scmp.eq.s32.totalorder %s20, 3
      %p153 = por %p151, %p152
      %p155 = scmp.ne.s32.totalorder %s138, %s154
      %p156 = scmp.eq.s32.totalorder %s20, 0
      %p157 = por %p155, %p156
      %p158 = scmp.le.s32.totalorder 1, %s14
      %p159 = scmp.lt.s32.totalorder %s14, 5
      %p160 = pnand %p158, %p159
      %p161 = pneg %p160
      // Predicated region
      $region9: #{adaptive_graph_learner.5} parent=5 // pred_check
        _
      $region10: #{adaptive_graph_learner.5} parent=5 // pred_check_branch
        %163 = sbr.rel (%p160) target = $region12
      $region11: #{adaptive_graph_learner.5} parent=5 // pred_region
        %s164 = ssub.s32 %s14, 1
        // Predicated region
        $region13: #{adaptive_graph_learner.5} parent=11 // pred_check
          %p165 = pneg %p61
        $region14: #{adaptive_graph_learner.5} parent=11 // pred_check_branch
          %167 = sbr.rel (%p165) target = $region16
        $region15: #{adaptive_graph_learner.5} parent=11 // pred_region
          _
        $region16: #{adaptive_graph_learner.5} parent=11 // pred_fallthru
          _
        // Predicated region
        $region17: #{adaptive_graph_learner.5} parent=11 // pred_check
          %p168 = pneg %p82
        $region18: #{adaptive_graph_learner.5} parent=11 // pred_check_branch
          %170 = sbr.rel (%p168) target = $region20
        $region19: #{adaptive_graph_learner.5} parent=11 // pred_region
          _
        $region20: #{adaptive_graph_learner.5} parent=11 // pred_fallthru
          _
        // Predicated region
        $region21: #{adaptive_graph_learner.5} parent=11 // pred_check
          %p171 = pneg %p103
        $region22: #{adaptive_graph_learner.5} parent=11 // pred_check_branch
          %173 = sbr.rel (%p171) target = $region24
        $region23: #{adaptive_graph_learner.5} parent=11 // pred_region
          _
        $region24: #{adaptive_graph_learner.5} parent=11 // pred_fallthru
          _
        // Predicated region
        $region25: #{adaptive_graph_learner.5} parent=11 // pred_check
          %p174 = pneg %p124
        $region26: #{adaptive_graph_learner.5} parent=11 // pred_check_branch
          %176 = sbr.rel (%p174) target = $region28
        $region27: #{adaptive_graph_learner.5} parent=11 // pred_region
          _
        $region28: #{adaptive_graph_learner.5} parent=11 // pred_fallthru
          _
      $region12: #{adaptive_graph_learner.5} parent=5 // pred_fallthru
        _
      %p177 = scmp.lt.s32.totalorder %s14, 4
      // Predicated region
      $region29: #{adaptive_graph_learner.5} parent=5 // pred_check
        %p178 = pneg %p177
      $region30: #{adaptive_graph_learner.5} parent=5 // pred_check_branch
        %180 = sbr.rel (%p178) target = $region32
      $region31: #{adaptive_graph_learner.5} parent=5 // pred_region
        // Predicated region
        $region33: #{adaptive_graph_learner.5} parent=31 // pred_check
          %p181 = pneg %p34
        $region34: #{adaptive_graph_learner.5} parent=31 // pred_check_branch
          %183 = sbr.rel (%p181) target = $region36
        $region35: #{adaptive_graph_learner.5} parent=31 // pred_region
          %s184 = smul.u32 2, %s14
          %p185 = scmp.lt.s32.totalorder %s184, 7
          %s186 = scalar_select %p185, %s184, 7
          %s187 = smul.addr %s186, 8
          %s188 = scalar_lea.vmem %s0, %s187
          %s189 = smul.u32 2, %s14
        $region36: #{adaptive_graph_learner.5} parent=31 // pred_fallthru
          _
      $region32: #{adaptive_graph_learner.5} parent=5 // pred_fallthru
        _
      %p190 = scmp.le.s32.totalorder 1, %s14
      %p191 = scmp.lt.s32.totalorder %s14, 5
      %p192 = pnand %p190, %p191
      %p193 = pneg %p192
      // Predicated region
      $region37: #{adaptive_graph_learner.5} parent=5 // pred_check
        _
      $region38: #{adaptive_graph_learner.5} parent=5 // pred_check_branch
        %195 = sbr.rel (%p192) target = $region40
      $region39: #{adaptive_graph_learner.5} parent=5 // pred_region
        %s196 = ssub.s32 %s14, 1
        %s197 = smul.u32 2, %s19
        %p198 = scmp.lt.s32.totalorder %s197, 7
        %s199 = scalar_select %p198, %s197, 7
        %s200 = smul.addr %s199, 8
        %s201 = scalar_lea.vmem %s0, %s200
        %p202 = pneg %p40
        %p203 = pneg %p37
        %p204 = pneg %p61
        %p205 = pneg %p58
        %p206 = pneg %p82
        %p207 = pneg %p79
        %p208 = pneg %p103
        %p209 = pneg %p100
        %p210 = pneg %p124
        %p211 = pneg %p121
        %p212 = pneg %p150
        %p213 = pneg %p147
        %s214 = sand.u32 %s137, 1
        %s215 = scalar_lea.sflag [#allocation3], %s214
        %s216 = sand.u32 %s137, 1
        %s217 = smul.addr %s216, 16
        %s218 = scalar_lea.vmem [#allocation2], %s217
        %s219 = smul.u32 2, %s19
        %p220 = scmp.lt.s32.totalorder %s219, 7
        %s221 = scalar_select %p220, %s219, 7
        %s222 = smul.addr %s221, 8
        %s223 = scalar_lea.vmem %s0, %s222
        %s224 = smul.u32 2, %s19
        %s225 = smul.u32 2, %s19
        %v226 = vld [vmem:[%s223] sm:$0xff]
        %v227 = vld [vmem:[%s223 + $0x8] sm:$0xff]
        %v228 = vld [vmem:[%s1] sm:$0x1]
        %v230 = vlaneseq
        %v231 = vshrl.u32 %v230, 7
        %v232 = vsub.s32 0, %v231
        %v233 = vrot.slane %v228, %v232
        %v235 = vsub.f32 %v226, %v233
        %v236 = vsub.f32 %v227, %v233
        %v237 = vld [vmem:[%s2] sm:$0x1]
        %v239 = vlaneseq
        %v240 = vshrl.u32 %v239, 7
        %v241 = vsub.s32 0, %v240
        %v242 = vrot.slane %v237, %v241
        %v244 = vmul.f32 %v235, %v242
        %v245 = vmul.f32 %v236, %v242
        %v246 = vmax.f32 %v244, 0.0
        %v247 = vmax.f32 %v245, 0.0
        %vm248 = vcmask 261120
        %v250 = vsel %vm248, %v246, 0
        %v253 = vsel %vm248, %v247, 0
        %255 = vmatprep.subr.mxu0 0.0
        %256 = vmatpush1.xpose.msra.mxu0 %v250
        %257 = vmatprep.subr.mxu0 0.0
        %258 = vmatpush1.xpose.msra.mxu0 %v253
        %259 = vmatprep.subr.mxu0 0.0
        %260 = vmatpush1.xpose.msra.mxu0 0.0
        %261 = vmatprep.subr.mxu0 0.0
        %262 = vmatpush1.xpose.msra.mxu0 0.0
        %263 = vmatprep.subr.mxu0 0.0
        %264 = vmatpush1.xpose.msra.mxu0 0.0
        %265 = vmatprep.subr.mxu0 0.0
        %266 = vmatpush1.xpose.msra.mxu0 0.0
        %267 = vmatprep.subr.mxu0 0.0
        %268 = vmatpush1.xpose.msra.mxu0 0.0
        %269 = vmatprep.subr.mxu0 0.0
        %270 = vmatpush1.xpose.msra.mxu0 0.0
        %271 = vmatprep.subr.mxu0 0.0
        %272 = vmatpush1.xpose.msra.mxu0 0.0
        %273 = vmatprep.subr.mxu0 0.0
        %274 = vmatpush1.xpose.msra.mxu0 0.0
        %275 = vmatprep.subr.mxu0 0.0
        %276 = vmatpush1.xpose.msra.mxu0 0.0
        %277 = vmatprep.subr.mxu0 0.0
        %278 = vmatpush1.xpose.msra.mxu0 0.0
        %279 = vmatprep.subr.mxu0 0.0
        %280 = vmatpush1.xpose.msra.mxu0 0.0
        %281 = vmatprep.subr.mxu0 0.0
        %282 = vmatpush1.xpose.msra.mxu0 0.0
        %283 = vmatprep.subr.mxu0 0.0
        %284 = vmatpush1.xpose.msra.mxu0 0.0
        %285 = vmatprep.subr.mxu0 0.0
        %286 = vmatpush1.xpose.msra.mxu0 0.0
        %287 = vmatprep.subr.mxu0 0.0
        %288 = vmatpush1.xpose.msra.mxu0 0.0
        %289 = vmatprep.subr.mxu0 0.0
        %290 = vmatpush1.xpose.msra.mxu0 0.0
        %291 = vmatprep.subr.mxu0 0.0
        %292 = vmatpush1.xpose.msra.mxu0 0.0
        %293 = vmatprep.subr.mxu0 0.0
        %294 = vmatpush1.xpose.msra.mxu0 0.0
        %295 = vmatprep.subr.mxu0 0.0
        %296 = vmatpush1.xpose.msra.mxu0 0.0
        %297 = vmatprep.subr.mxu0 0.0
        %298 = vmatpush1.xpose.msra.mxu0 0.0
        %299 = vmatprep.subr.mxu0 0.0
        %300 = vmatpush1.xpose.msra.mxu0 0.0
        %301 = vmatprep.subr.mxu0 0.0
        %302 = vmatpush1.xpose.msra.mxu0 0.0
        %303 = vmatprep.subr.mxu0 0.0
        %304 = vmatpush1.xpose.msra.mxu0 0.0
        %305 = vmatprep.subr.mxu0 0.0
        %306 = vmatpush1.xpose.msra.mxu0 0.0
        %307 = vmatprep.subr.mxu0 0.0
        %308 = vmatpush1.xpose.msra.mxu0 0.0
        %309 = vmatprep.subr.mxu0 0.0
        %310 = vmatpush1.xpose.msra.mxu0 0.0
        %311 = vmatprep.subr.mxu0 0.0
        %312 = vmatpush1.xpose.msra.mxu0 0.0
        %313 = vmatprep.subr.mxu0 0.0
        %314 = vmatpush1.xpose.msra.mxu0 0.0
        %315 = vmatprep.subr.mxu0 0.0
        %316 = vmatpush1.xpose.msra.mxu0 0.0
        %317 = vmatprep.subr.mxu0 0.0
        %318 = vmatpush1.xpose.msra.mxu0 0.0
        %319 = vmatprep.mubr.f32.mxu0 0.0
        %320 = vmatmul.mubr.f32.gmra.mrb[0].mxu0 %v250
        %v321 = vpop.f32.mrb[0].mxu0
        %v322 = vadd.f32 0.0, %v321
        %v323 = vpop.f32.mrb[0].mxu0
        %324 = vmatprep.mubr.f32.mxu0 0.0
        %325 = vmatmul.mubr.f32.gmra.mrb[0].mxu0 %v253
        %v326 = vpop.f32.mrb[0].mxu0
        %v327 = vadd.f32 0.0, %v326
        %v328 = vpop.f32.mrb[0].mxu0
        %329 = vdwg.mxu0
        %v330 = vld [vmem:[%s4] sm:$0xff]
        %v331 = vld [vmem:[%s4 + $0x8] sm:$0xff]
        %v332 = vmul.f32 %v322, %v330
        %v333 = vmul.f32 %v327, %v331
        %v334 = vmul.f32 %v332, %v332
        %v335 = vmul.f32 %v333, %v333
        %vm336 = vcmask 130048
        %v337 = vsel %vm336, %v334, 0.0
        %338 = vadd.xlane.f32.xlu0 %v337
        %v339 = vpop.xlane.xlu0 %338
        %v340 = vsel %vm336, %v335, 0.0
        %341 = vadd.xlane.f32.xlu0 %v340
        %v342 = vpop.xlane.xlu0 %341
        %v343 = vrsqrt.pop %v339
        %v344 = vmul.f32 %v339, %v343
        %vm345 = vcmp.eq.f32.partialorder %v339, inf
        %v346 = vsel %vm345, %v339, %v344
        %vm347 = vcmp.eq.f32.partialorder %v339, 0.0
        %v348 = vand.u32 %v339, 2147483648
        %v349 = vsel %vm347, %v348, %v346
        %v350 = vrsqrt.pop %v342
        %v351 = vmul.f32 %v342, %v350
        %vm352 = vcmp.eq.f32.partialorder %v342, inf
        %v353 = vsel %vm352, %v342, %v351
        %vm354 = vcmp.eq.f32.partialorder %v342, 0.0
        %v355 = vand.u32 %v342, 2147483648
        %v356 = vsel %vm354, %v355, %v353
        %v357 = vmax.f32 %v349, 1e-12
        %v358 = vmax.f32 %v356, 1e-12
        %v359 = vrcp.pop %v357
        %v360 = vmul.f32 1.0, %v359
        %v361 = vrcp.pop %v358
        %v362 = vmul.f32 1.0, %v361
        %v363 = vmul.f32 %v332, %v360
        %v364 = vmul.f32 %v333, %v362
        %v365 = vld [vmem:[%s3] sm:$0xff]
        %v366 = vld [vmem:[%s3 + $0x8] sm:$0xff]
        %v367 = vadd.f32 %v365, %v363
        %v368 = vadd.f32 %v366, %v364
        %v369 = vmax.f32 %v367, 0.0
        %v370 = vmax.f32 %v368, 0.0
        %v371 = vmul.f32 %v369, %v369
        %v372 = vmul.f32 %v370, %v370
        %v373 = vsel %vm336, %v371, 0.0
        %374 = vadd.xlane.f32.xlu0 %v373
        %v375 = vpop.xlane.xlu0 %374
        %v376 = vsel %vm336, %v372, 0.0
        %377 = vadd.xlane.f32.xlu0 %v376
        %v378 = vpop.xlane.xlu0 %377
        %v379 = vrsqrt.pop %v375
        %v380 = vmul.f32 %v375, %v379
        %vm381 = vcmp.eq.f32.partialorder %v375, inf
        %v382 = vsel %vm381, %v375, %v380
        %vm383 = vcmp.eq.f32.partialorder %v375, 0.0
        %v384 = vand.u32 %v375, 2147483648
        %v385 = vsel %vm383, %v384, %v382
        %v386 = vrsqrt.pop %v378
        %v387 = vmul.f32 %v378, %v386
        %vm388 = vcmp.eq.f32.partialorder %v378, inf
        %v389 = vsel %vm388, %v378, %v387
        %vm390 = vcmp.eq.f32.partialorder %v378, 0.0
        %v391 = vand.u32 %v378, 2147483648
        %v392 = vsel %vm390, %v391, %v389
        %v393 = vmax.f32 %v385, 1e-12
        %v394 = vmax.f32 %v392, 1e-12
        %v395 = vrcp.pop %v393
        %v396 = vmul.f32 1.0, %v395
        %v397 = vrcp.pop %v394
        %v398 = vmul.f32 1.0, %v397
        %v399 = vmul.f32 %v369, %v396
        %v400 = vmul.f32 %v370, %v398
        %401 = vst.msk [vmem:[%s218] sm:$0xff] %vm336, %v399
        %402 = vst.msk [vmem:[%s218 + $0x8] sm:$0xff] %vm336, %v400
        %s403 = sand.u32 %s137, 1
        %s404 = scalar_lea.sflag [#allocation3], %s403
        %s405 = sand.u32 %s137, 1
        %s406 = smul.addr %s405, 16
        %s407 = scalar_lea.vmem [#allocation2], %s406
        // Predicated region
        $region41: #{adaptive_graph_learner.5} parent=39 // pred_check
          %p408 = pneg %p147
        $region42: #{adaptive_graph_learner.5} parent=39 // pred_check_branch
          %410 = sbr.rel (%p408) target = $region44
        $region43: #{adaptive_graph_learner.5} parent=39 // pred_region
          %s411 = smul.u32 2, %s19
          %s413 = ssub.s32 256, 256
          %414 = vsyncadd %s404, %s413
          %s415 = smul.addr %s411, 128
          %s416 = scalar_lea.hbm %s5, %s415
          %s417 = sshll.u32 %s407, 4
          %s418 = int_to_ptr.vmem [resolvable:$true] %s417
          %423 = dma.vmem_to_hbm [thread:$0]  %s418, 256, %s416, %s404, 128, 128, 8
        $region44: #{adaptive_graph_learner.5} parent=39 // pred_fallthru
          _
      $region40: #{adaptive_graph_learner.5} parent=5 // pred_fallthru
        _
      %p424 = scmp.le.s32.totalorder 2, %s14
      // Predicated region
      $region45: #{adaptive_graph_learner.5} parent=5 // pred_check
        %p425 = pneg %p424
      $region46: #{adaptive_graph_learner.5} parent=5 // pred_check_branch
        %427 = sbr.rel (%p425) target = $region48
      $region47: #{adaptive_graph_learner.5} parent=5 // pred_region
        %s428 = ssub.s32 %s14, 2
        // Predicated region
        $region49: #{adaptive_graph_learner.5} parent=47 // pred_check
          %p429 = pneg %p153
        $region50: #{adaptive_graph_learner.5} parent=47 // pred_check_branch
          %431 = sbr.rel (%p429) target = $region52
        $region51: #{adaptive_graph_learner.5} parent=47 // pred_region
          %s432 = sand.u32 %s138, 1
          %s433 = scalar_lea.sflag [#allocation3], %s432
          %s434 = sand.u32 %s138, 1
          %s435 = smul.addr %s434, 16
          %s436 = scalar_lea.vmem [#allocation2], %s435
          %437 = dma.done %s433, 256
        $region52: #{adaptive_graph_learner.5} parent=47 // pred_fallthru
          _
      $region48: #{adaptive_graph_learner.5} parent=5 // pred_fallthru
        _
    $region6: #{adaptive_graph_learner.5} parent=1 // loop_footer
      %s18 = sadd.s32 1, %s14
    $region7: #{adaptive_graph_learner.5} parent=1 // loop_footer_branch
      %13 = sbr.rel target = $region3
    $region8: #{adaptive_graph_learner.5} parent=1 // loop_exit
      _
    %438 = vsyncpa [#allocation3], 1
    %s439 = scalar_lea.sflag [#allocation3], 1
    %440 = vsyncpa %s439, 1

// kernel: adaptive_graph_learner.3
$region0: #{adaptive_graph_learner.3}
  #allocation0 [shape = 'u32[]', space=smem, size = 0x4, offset = 0x4, fixed_abs, tag = 'smem constant byte address 0x4 - core index']
  #allocation1 [shape = 'u32[144,128]{1,0:T(1,128)}', space=vmem, size = 0x12000, scoped, tag = 'internal scratch']
  %s0 = inlined_call_operand.vmem [shape: f32[64,16], index: 0, kind: input, shape index: {}]
  %s1 = inlined_call_operand.vmem [shape: f32[16,256], index: 1, kind: input, shape index: {}]
  %s2 = inlined_call_operand.vmem [shape: f32[1,256], index: 2, kind: input, shape index: {}]
  %s3 = inlined_call_operand.vmem [shape: f32[256,256], index: 3, kind: input, shape index: {}]
  %s4 = inlined_call_operand.vmem [shape: f32[1,256], index: 4, kind: input, shape index: {}]
  %s5 = inlined_call_operand.vmem [shape: f32[256,32], index: 5, kind: input, shape index: {}]
  %s6 = inlined_call_operand.vmem [shape: f32[1,32], index: 6, kind: input, shape index: {}]
  %s7 = inlined_call_operand.hbm [shape: f32[32,96], index: 7, kind: input, shape index: {}]
  %s8 = inlined_call_operand.vmem [shape: f32[1,96], index: 8, kind: input, shape index: {}]
  %s9 = inlined_call_operand.vmem [shape: f32[64,96], index: 9, kind: output, shape index: {}]
  %s10 = sld [smem:[#allocation0]]
  $region73: #{adaptive_graph_learner.3} parent=0
    _
  %s12 = ssub.s32 1, %s10
  %s13 = scalar_select 0, %s12, %s10
  $region1: #{adaptive_graph_learner.3} parent=0
    #allocation2 [shape = 'u8[16384]{0}', space=vmem, size = 0x4000, scoped, tag = 'input window, operand 7, single buffered']
    #allocation3 [shape = 's32[2]{0}', space=sflag, size = 0x8, scoped, tag = 'scoped memory for adaptive_graph_learner.3']
    %14 = vsyncpa [#allocation3], 0
    loop: start=0, step=1, limit=6
    $region2: #{adaptive_graph_learner.3} parent=1 // loop_pre_header
      _
    $region3: #{adaptive_graph_learner.3} parent=1 // loop_header
      %s16 = sphi 0, %s20
      %p17 = scmp.ge.s32.totalorder %s16, 6
      %s26 = sphi 0, %s28
      %s29 = sphi 0, %s26
      %s30 = sphi 0, %s29
      %s46 = sphi 0, %s30
      %s50 = sphi 0, %s50
      %s52 = sphi 0, %s50
      %s53 = sphi 0, %s52
      %s67 = sphi 0, %s53
      %s71 = sphi 0, %s71
      %s73 = sphi 0, %s71
      %s74 = sphi 0, %s73
      %s88 = sphi 0, %s74
      %s92 = sphi 0, %s92
      %s94 = sphi 0, %s92
      %s95 = sphi 0, %s94
      %s109 = sphi 0, %s95
      %s113 = sphi 0, %s113
      %s115 = sphi 0, %s113
      %s116 = sphi 0, %s115
      %s130 = sphi 0, %s116
      %s134 = sphi 0, %s134
      %s136 = sphi 0, %s134
      %s137 = sphi 0, %s136
      %s151 = sphi 0, %s137
      %s155 = sphi 0, %s155
      %s157 = sphi 0, %s155
      %s158 = sphi 0, %s157
      %s172 = sphi 0, %s158
      %s176 = sphi 0, %s176
      %s178 = sphi 0, %s176
      %s179 = sphi 0, %s178
      %s193 = sphi 0, %s179
      %s197 = sphi 0, %s197
      %s199 = sphi 0, %s197
      %s200 = sphi 0, %s199
      %s214 = sphi 0, %s200
      %s220 = sphi 0, %s222
      %s223 = sphi 0, %s220
      %s224 = sphi 0, %s223
      %s240 = sphi 0, %s224
    $region4: #{adaptive_graph_learner.3} parent=1 // loop_header_branch
      %19 = sbr.rel (%p17) target = $region8
    $region5: #{adaptive_graph_learner.3} parent=1 // loop_body
      %s21 = ssub.s32 %s16, 1
      %s22 = ssub.s32 %s16, 2
      %s23 = sadd.s32 %s16, 1
      %s24 = ssub.s32 %s16, %s23
      %p25 = scmp.eq.s32.totalorder %s24, 0
      %s27 = sadd.s32 %s26, 1
      %s28 = scalar_select %p25, %s26, %s27
      %p31 = pneg %p25
      %p32 = scmp.eq.s32.totalorder %s16, 3
      %p33 = por %p31, %p32
      %p34 = scmp.ne.s32.totalorder %s26, %s29
      %p35 = scmp.eq.s32.totalorder %s16, 0
      %p36 = por %p34, %p35
      %p37 = scmp.ne.s32.totalorder %s26, %s29
      %p38 = scmp.eq.s32.totalorder %s21, 3
      %p39 = por %p37, %p38
      %p40 = scmp.ne.s32.totalorder %s29, %s30
      %p41 = scmp.eq.s32.totalorder %s21, 0
      %p42 = por %p40, %p41
      %p43 = scmp.ne.s32.totalorder %s29, %s30
      %p44 = scmp.eq.s32.totalorder %s22, 3
      %p45 = por %p43, %p44
      %p47 = scmp.ne.s32.totalorder %s30, %s46
      %p48 = scmp.eq.s32.totalorder %s22, 0
      %p49 = por %p47, %p48
      %s51 = sadd.s32 %s50, 1
      %p54 = scmp.eq.s32.totalorder %s16, 3
      %p55 = scmp.ne.s32.totalorder %s50, %s52
      %p56 = scmp.eq.s32.totalorder %s16, 0
      %p57 = por %p55, %p56
      %p58 = scmp.ne.s32.totalorder %s50, %s52
      %p59 = scmp.eq.s32.totalorder %s21, 3
      %p60 = por %p58, %p59
      %p61 = scmp.ne.s32.totalorder %s52, %s53
      %p62 = scmp.eq.s32.totalorder %s21, 0
      %p63 = por %p61, %p62
      %p64 = scmp.ne.s32.totalorder %s52, %s53
      %p65 = scmp.eq.s32.totalorder %s22, 3
      %p66 = por %p64, %p65
      %p68 = scmp.ne.s32.totalorder %s53, %s67
      %p69 = scmp.eq.s32.totalorder %s22, 0
      %p70 = por %p68, %p69
      %s72 = sadd.s32 %s71, 1
      %p75 = scmp.eq.s32.totalorder %s16, 3
      %p76 = scmp.ne.s32.totalorder %s71, %s73
      %p77 = scmp.eq.s32.totalorder %s16, 0
      %p78 = por %p76, %p77
      %p79 = scmp.ne.s32.totalorder %s71, %s73
      %p80 = scmp.eq.s32.totalorder %s21, 3
      %p81 = por %p79, %p80
      %p82 = scmp.ne.s32.totalorder %s73, %s74
      %p83 = scmp.eq.s32.totalorder %s21, 0
      %p84 = por %p82, %p83
      %p85 = scmp.ne.s32.totalorder %s73, %s74
      %p86 = scmp.eq.s32.totalorder %s22, 3
      %p87 = por %p85, %p86
      %p89 = scmp.ne.s32.totalorder %s74, %s88
      %p90 = scmp.eq.s32.totalorder %s22, 0
      %p91 = por %p89, %p90
      %s93 = sadd.s32 %s92, 1
      %p96 = scmp.eq.s32.totalorder %s16, 3
      %p97 = scmp.ne.s32.totalorder %s92, %s94
      %p98 = scmp.eq.s32.totalorder %s16, 0
      %p99 = por %p97, %p98
      %p100 = scmp.ne.s32.totalorder %s92, %s94
      %p101 = scmp.eq.s32.totalorder %s21, 3
      %p102 = por %p100, %p101
      %p103 = scmp.ne.s32.totalorder %s94, %s95
      %p104 = scmp.eq.s32.totalorder %s21, 0
      %p105 = por %p103, %p104
      %p106 = scmp.ne.s32.totalorder %s94, %s95
      %p107 = scmp.eq.s32.totalorder %s22, 3
      %p108 = por %p106, %p107
      %p110 = scmp.ne.s32.totalorder %s95, %s109
      %p111 = scmp.eq.s32.totalorder %s22, 0
      %p112 = por %p110, %p111
      %s114 = sadd.s32 %s113, 1
      %p117 = scmp.eq.s32.totalorder %s16, 3
      %p118 = scmp.ne.s32.totalorder %s113, %s115
      %p119 = scmp.eq.s32.totalorder %s16, 0
      %p120 = por %p118, %p119
      %p121 = scmp.ne.s32.totalorder %s113, %s115
      %p122 = scmp.eq.s32.totalorder %s21, 3
      %p123 = por %p121, %p122
      %p124 = scmp.ne.s32.totalorder %s115, %s116
      %p125 = scmp.eq.s32.totalorder %s21, 0
      %p126 = por %p124, %p125
      %p127 = scmp.ne.s32.totalorder %s115, %s116
      %p128 = scmp.eq.s32.totalorder %s22, 3
      %p129 = por %p127, %p128
      %p131 = scmp.ne.s32.totalorder %s116, %s130
      %p132 = scmp.eq.s32.totalorder %s22, 0
      %p133 = por %p131, %p132
      %s135 = sadd.s32 %s134, 1
      %p138 = scmp.eq.s32.totalorder %s16, 3
      %p139 = scmp.ne.s32.totalorder %s134, %s136
      %p140 = scmp.eq.s32.totalorder %s16, 0
      %p141 = por %p139, %p140
      %p142 = scmp.ne.s32.totalorder %s134, %s136
      %p143 = scmp.eq.s32.totalorder %s21, 3
      %p144 = por %p142, %p143
      %p145 = scmp.ne.s32.totalorder %s136, %s137
      %p146 = scmp.eq.s32.totalorder %s21, 0
      %p147 = por %p145, %p146
      %p148 = scmp.ne.s32.totalorder %s136, %s137
      %p149 = scmp.eq.s32.totalorder %s22, 3
      %p150 = por %p148, %p149
      %p152 = scmp.ne.s32.totalorder %s137, %s151
      %p153 = scmp.eq.s32.totalorder %s22, 0
      %p154 = por %p152, %p153
      %s156 = sadd.s32 %s155, 1
      %p159 = scmp.eq.s32.totalorder %s16, 3
      %p160 = scmp.ne.s32.totalorder %s155, %s157
      %p161 = scmp.eq.s32.totalorder %s16, 0
      %p162 = por %p160, %p161
      %p163 = scmp.ne.s32.totalorder %s155, %s157
      %p164 = scmp.eq.s32.totalorder %s21, 3
      %p165 = por %p163, %p164
      %p166 = scmp.ne.s32.totalorder %s157, %s158
      %p167 = scmp.eq.s32.totalorder %s21, 0
      %p168 = por %p166, %p167
      %p169 = scmp.ne.s32.totalorder %s157, %s158
      %p170 = scmp.eq.s32.totalorder %s22, 3
      %p171 = por %p169, %p170
      %p173 = scmp.ne.s32.totalorder %s158, %s172
      %p174 = scmp.eq.s32.totalorder %s22, 0
      %p175 = por %p173, %p174
      %s177 = sadd.s32 %s176, 1
      %p180 = scmp.eq.s32.totalorder %s16, 3
      %p181 = scmp.ne.s32.totalorder %s176, %s178
      %p182 = scmp.eq.s32.totalorder %s16, 0
      %p183 = por %p181, %p182
      %p184 = scmp.ne.s32.totalorder %s176, %s178
      %p185 = scmp.eq.s32.totalorder %s21, 3
      %p186 = por %p184, %p185
      %p187 = scmp.ne.s32.totalorder %s178, %s179
      %p188 = scmp.eq.s32.totalorder %s21, 0
      %p189 = por %p187, %p188
      %p190 = scmp.ne.s32.totalorder %s178, %s179
      %p191 = scmp.eq.s32.totalorder %s22, 3
      %p192 = por %p190, %p191
      %p194 = scmp.ne.s32.totalorder %s179, %s193
      %p195 = scmp.eq.s32.totalorder %s22, 0
      %p196 = por %p194, %p195
      %s198 = sadd.s32 %s197, 1
      %p201 = scmp.eq.s32.totalorder %s16, 3
      %p202 = scmp.ne.s32.totalorder %s197, %s199
      %p203 = scmp.eq.s32.totalorder %s16, 0
      %p204 = por %p202, %p203
      %p205 = scmp.ne.s32.totalorder %s197, %s199
      %p206 = scmp.eq.s32.totalorder %s21, 3
      %p207 = por %p205, %p206
      %p208 = scmp.ne.s32.totalorder %s199, %s200
      %p209 = scmp.eq.s32.totalorder %s21, 0
      %p210 = por %p208, %p209
      %p211 = scmp.ne.s32.totalorder %s199, %s200
      %p212 = scmp.eq.s32.totalorder %s22, 3
      %p213 = por %p211, %p212
      %p215 = scmp.ne.s32.totalorder %s200, %s214
      %p216 = scmp.eq.s32.totalorder %s22, 0
      %p217 = por %p215, %p216
      %s218 = ssub.s32 %s16, %s23
      %p219 = scmp.eq.s32.totalorder %s218, 0
      %s221 = sadd.s32 %s220, 1
      %s222 = scalar_select %p219, %s220, %s221
      %p225 = pneg %p219
      %p226 = scmp.eq.s32.totalorder %s16, 3
      %p227 = por %p225, %p226
      %p228 = scmp.ne.s32.totalorder %s220, %s223
      %p229 = scmp.eq.s32.totalorder %s16, 0
      %p230 = por %p228, %p229
      %p231 = scmp.ne.s32.totalorder %s220, %s223
      %p232 = scmp.eq.s32.totalorder %s21, 3
      %p233 = por %p231, %p232
      %p234 = scmp.ne.s32.totalorder %s223, %s224
      %p235 = scmp.eq.s32.totalorder %s21, 0
      %p236 = por %p234, %p235
      %p237 = scmp.ne.s32.totalorder %s223, %s224
      %p238 = scmp.eq.s32.totalorder %s22, 3
      %p239 = por %p237, %p238
      %p241 = scmp.ne.s32.totalorder %s224, %s240
      %p242 = scmp.eq.s32.totalorder %s22, 0
      %p243 = por %p241, %p242
      %p244 = scmp.le.s32.totalorder 1, %s16
      %p245 = scmp.lt.s32.totalorder %s16, 5
      %p246 = pnand %p244, %p245
      %p247 = pneg %p246
      // Predicated region
      $region9: #{adaptive_graph_learner.3} parent=5 // pred_check
        _
      $region10: #{adaptive_graph_learner.3} parent=5 // pred_check_branch
        %249 = sbr.rel (%p246) target = $region12
      $region11: #{adaptive_graph_learner.3} parent=5 // pred_region
        %s250 = ssub.s32 %s16, 1
        // Predicated region
        $region13: #{adaptive_graph_learner.3} parent=11 // pred_check
          %p251 = pneg %p63
        $region14: #{adaptive_graph_learner.3} parent=11 // pred_check_branch
          %253 = sbr.rel (%p251) target = $region16
        $region15: #{adaptive_graph_learner.3} parent=11 // pred_region
          _
        $region16: #{adaptive_graph_learner.3} parent=11 // pred_fallthru
          _
        // Predicated region
        $region17: #{adaptive_graph_learner.3} parent=11 // pred_check
          %p254 = pneg %p84
        $region18: #{adaptive_graph_learner.3} parent=11 // pred_check_branch
          %256 = sbr.rel (%p254) target = $region20
        $region19: #{adaptive_graph_learner.3} parent=11 // pred_region
          _
        $region20: #{adaptive_graph_learner.3} parent=11 // pred_fallthru
          _
        // Predicated region
        $region21: #{adaptive_graph_learner.3} parent=11 // pred_check
          %p257 = pneg %p105
        $region22: #{adaptive_graph_learner.3} parent=11 // pred_check_branch
          %259 = sbr.rel (%p257) target = $region24
        $region23: #{adaptive_graph_learner.3} parent=11 // pred_region
          _
        $region24: #{adaptive_graph_learner.3} parent=11 // pred_fallthru
          _
        // Predicated region
        $region25: #{adaptive_graph_learner.3} parent=11 // pred_check
          %p260 = pneg %p126
        $region26: #{adaptive_graph_learner.3} parent=11 // pred_check_branch
          %262 = sbr.rel (%p260) target = $region28
        $region27: #{adaptive_graph_learner.3} parent=11 // pred_region
          _
        $region28: #{adaptive_graph_learner.3} parent=11 // pred_fallthru
          _
        // Predicated region
        $region29: #{adaptive_graph_learner.3} parent=11 // pred_check
          %p263 = pneg %p147
        $region30: #{adaptive_graph_learner.3} parent=11 // pred_check_branch
          %265 = sbr.rel (%p263) target = $region32
        $region31: #{adaptive_graph_learner.3} parent=11 // pred_region
          _
        $region32: #{adaptive_graph_learner.3} parent=11 // pred_fallthru
          _
        // Predicated region
        $region33: #{adaptive_graph_learner.3} parent=11 // pred_check
          %p266 = pneg %p168
        $region34: #{adaptive_graph_learner.3} parent=11 // pred_check_branch
          %268 = sbr.rel (%p266) target = $region36
        $region35: #{adaptive_graph_learner.3} parent=11 // pred_region
          _
        $region36: #{adaptive_graph_learner.3} parent=11 // pred_fallthru
          _
        // Predicated region
        $region37: #{adaptive_graph_learner.3} parent=11 // pred_check
          %p269 = pneg %p189
        $region38: #{adaptive_graph_learner.3} parent=11 // pred_check_branch
          %271 = sbr.rel (%p269) target = $region40
        $region39: #{adaptive_graph_learner.3} parent=11 // pred_region
          %s273 = ssub.s32 512, 512
          %274 = vsyncadd [#allocation3], %s273
          %s275 = sshll.u32 [#allocation2], 4
          %s276 = int_to_ptr.vmem [resolvable:$true] %s275
          %281 = dma.hbm_to_vmem [thread:$0]  %s7, 512, %s276, [#allocation3], 128, 128, 8
        $region40: #{adaptive_graph_learner.3} parent=11 // pred_fallthru
          _
        // Predicated region
        $region41: #{adaptive_graph_learner.3} parent=11 // pred_check
          %p282 = pneg %p210
        $region42: #{adaptive_graph_learner.3} parent=11 // pred_check_branch
          %284 = sbr.rel (%p282) target = $region44
        $region43: #{adaptive_graph_learner.3} parent=11 // pred_region
          _
        $region44: #{adaptive_graph_learner.3} parent=11 // pred_fallthru
          _
      $region12: #{adaptive_graph_learner.3} parent=5 // pred_fallthru
        _
      %p285 = scmp.lt.s32.totalorder %s16, 4
      // Predicated region
      $region45: #{adaptive_graph_learner.3} parent=5 // pred_check
        %p286 = pneg %p285
      $region46: #{adaptive_graph_learner.3} parent=5 // pred_check_branch
        %288 = sbr.rel (%p286) target = $region48
      $region47: #{adaptive_graph_learner.3} parent=5 // pred_region
        // Predicated region
        $region49: #{adaptive_graph_learner.3} parent=47 // pred_check
          %p289 = pneg %p36
        $region50: #{adaptive_graph_learner.3} parent=47 // pred_check_branch
          %291 = sbr.rel (%p289) target = $region52
        $region51: #{adaptive_graph_learner.3} parent=47 // pred_region
          %s292 = smul.u32 2, %s16
          %p293 = scmp.lt.s32.totalorder %s292, 7
          %s294 = scalar_select %p293, %s292, 7
          %s295 = smul.addr %s294, 8
          %s296 = scalar_lea.vmem %s0, %s295
          %s297 = smul.u32 2, %s16
        $region52: #{adaptive_graph_learner.3} parent=47 // pred_fallthru
          _
      $region48: #{adaptive_graph_learner.3} parent=5 // pred_fallthru
        _
      %p298 = scmp.le.s32.totalorder 1, %s16
      %p299 = scmp.lt.s32.totalorder %s16, 5
      %p300 = pnand %p298, %p299
      %p301 = pneg %p300
      // Predicated region
      $region53: #{adaptive_graph_learner.3} parent=5 // pred_check
        _
      $region54: #{adaptive_graph_learner.3} parent=5 // pred_check_branch
        %303 = sbr.rel (%p300) target = $region56
      $region55: #{adaptive_graph_learner.3} parent=5 // pred_region
        %s304 = ssub.s32 %s16, 1
        // Predicated region
        $region57: #{adaptive_graph_learner.3} parent=55 // pred_check
          %p305 = pneg %p189
        $region58: #{adaptive_graph_learner.3} parent=55 // pred_check_branch
          %307 = sbr.rel (%p305) target = $region60
        $region59: #{adaptive_graph_learner.3} parent=55 // pred_region
          %308 = dma.done [#allocation3], 512
        $region60: #{adaptive_graph_learner.3} parent=55 // pred_fallthru
          _
        %s309 = smul.u32 2, %s21
        %p310 = scmp.lt.s32.totalorder %s309, 7
        %s311 = scalar_select %p310, %s309, 7
        %s312 = smul.addr %s311, 8
        %s313 = scalar_lea.vmem %s0, %s312
        %p314 = pneg %p42
        %p315 = pneg %p39
        %p316 = pneg %p63
        %p317 = pneg %p60
        %p318 = pneg %p84
        %p319 = pneg %p81
        %p320 = pneg %p105
        %p321 = pneg %p102
        %p322 = pneg %p126
        %p323 = pneg %p123
        %p324 = pneg %p147
        %p325 = pneg %p144
        %p326 = pneg %p168
        %p327 = pneg %p165
        %p328 = pneg %p189
        %p329 = pneg %p186
        %p330 = pneg %p210
        %p331 = pneg %p207
        %p332 = pneg %p236
        %p333 = pneg %p233
        %s334 = smul.u32 2, %s21
        %p335 = scmp.lt.s32.totalorder %s334, 7
        %s336 = scalar_select %p335, %s334, 7
        %s337 = smul.addr %s336, 8
        %s338 = scalar_lea.vmem %s9, %s337
        %s339 = smul.u32 2, %s21
        %p340 = scmp.lt.s32.totalorder %s339, 7
        %s341 = scalar_select %p340, %s339, 7
        %s342 = smul.addr %s341, 8
        %s343 = scalar_lea.vmem %s0, %s342
        %s344 = smul.u32 2, %s21
        %s345 = smul.u32 2, %s21
        %p346 = scmp.lt.s32.totalorder %s345, 7
        %s347 = scalar_select %p346, %s345, 7
        %s348 = smul.addr %s347, 8
        %s349 = scalar_lea.vmem %s9, %s348
        %s350 = smul.u32 2, %s21
        %v351 = vld [vmem:[%s343] sm:$0xff]
        %v352 = vld [vmem:[%s343 + $0x8] sm:$0xff]
        %v353 = vld [vmem:[%s1] sm:$0xff]
        %v354 = vld [vmem:[%s1 + $0x8] sm:$0xff]
        %v355 = vld [vmem:[%s1 + $0x10] sm:$0xff]
        %v356 = vld [vmem:[%s1 + $0x18] sm:$0xff]
        %v357 = vld [vmem:[%s2] sm:$0x3]
        %v359 = vlaneseq
        %v360 = vshrl.u32 %v359, 7
        %v361 = vsub.s32 0, %v360
        %v362 = vrot.slane %v357, %v361
        %v363 = vlaneseq
        %v364 = vshrl.u32 %v363, 7
        %v365 = vsub.s32 1, %v364
        %v366 = vrot.slane %v357, %v365
        %vm369 = vcmask 130048
        %v371 = vsel %vm369, %v351, 0
        %v374 = vsel %vm369, %v352, 0
        %376 = vmatprep.subr.mxu0 %v354
        %377 = vmatpush1.msra.mxu0 %v353
        %378 = vmatprep.subr.mxu0 %v356
        %379 = vmatpush1.msra.mxu0 %v355
        %380 = vmatprep.subr.mxu0 0.0
        %381 = vmatpush1.msra.mxu0 0.0
        %382 = vmatprep.subr.mxu0 0.0
        %383 = vmatpush1.msra.mxu0 0.0
        %384 = vmatprep.subr.mxu0 0.0
        %385 = vmatpush1.msra.mxu0 0.0
        %386 = vmatprep.subr.mxu0 0.0
        %387 = vmatpush1.msra.mxu0 0.0
        %388 = vmatprep.subr.mxu0 0.0
        %389 = vmatpush1.msra.mxu0 0.0
        %390 = vmatprep.subr.mxu0 0.0
        %391 = vmatpush1.msra.mxu0 0.0
        %392 = vmatprep.subr.mxu0 0.0
        %393 = vmatpush1.msra.mxu0 0.0
        %394 = vmatprep.subr.mxu0 0.0
        %395 = vmatpush1.msra.mxu0 0.0
        %396 = vmatprep.subr.mxu0 0.0
        %397 = vmatpush1.msra.mxu0 0.0
        %398 = vmatprep.subr.mxu0 0.0
        %399 = vmatpush1.msra.mxu0 0.0
        %400 = vmatprep.subr.mxu0 0.0
        %401 = vmatpush1.msra.mxu0 0.0
        %402 = vmatprep.subr.mxu0 0.0
        %403 = vmatpush1.msra.mxu0 0.0
        %404 = vmatprep.subr.mxu0 0.0
        %405 = vmatpush1.msra.mxu0 0.0
        %406 = vmatprep.subr.mxu0 0.0
        %407 = vmatpush1.msra.mxu0 0.0
        %408 = vmatprep.subr.mxu0 0.0
        %409 = vmatpush1.msra.mxu0 0.0
        %410 = vmatprep.subr.mxu0 0.0
        %411 = vmatpush1.msra.mxu0 0.0
        %412 = vmatprep.subr.mxu0 0.0
        %413 = vmatpush1.msra.mxu0 0.0
        %414 = vmatprep.subr.mxu0 0.0
        %415 = vmatpush1.msra.mxu0 0.0
        %416 = vmatprep.subr.mxu0 0.0
        %417 = vmatpush1.msra.mxu0 0.0
        %418 = vmatprep.subr.mxu0 0.0
        %419 = vmatpush1.msra.mxu0 0.0
        %420 = vmatprep.subr.mxu0 0.0
        %421 = vmatpush1.msra.mxu0 0.0
        %422 = vmatprep.subr.mxu0 0.0
        %423 = vmatpush1.msra.mxu0 0.0
        %424 = vmatprep.subr.mxu0 0.0
        %425 = vmatpush1.msra.mxu0 0.0
        %426 = vmatprep.subr.mxu0 0.0
        %427 = vmatpush1.msra.mxu0 0.0
        %428 = vmatprep.subr.mxu0 0.0
        %429 = vmatpush1.msra.mxu0 0.0
        %430 = vmatprep.subr.mxu0 0.0
        %431 = vmatpush1.msra.mxu0 0.0
        %432 = vmatprep.subr.mxu0 0.0
        %433 = vmatpush1.msra.mxu0 0.0
        %434 = vmatprep.subr.mxu0 0.0
        %435 = vmatpush1.msra.mxu0 0.0
        %436 = vmatprep.subr.mxu0 0.0
        %437 = vmatpush1.msra.mxu0 0.0
        %438 = vmatprep.subr.mxu0 0.0
        %439 = vmatpush1.msra.mxu0 0.0
        %440 = vmatprep.mubr.f32.mxu0 0.0
        %441 = vmatmul.mubr.f32.gmra.mrb[0].mxu0 %v371
        %v442 = vpop.f32.mrb[0].mxu0
        %v443 = vadd.f32 %v362, %v442
        %v444 = vpop.f32.mrb[0].mxu0
        %v445 = vadd.f32 %v366, %v444
        %446 = vmatprep.mubr.f32.mxu0 0.0
        %447 = vmatmul.mubr.f32.gmra.mrb[0].mxu0 %v374
        %v448 = vpop.f32.mrb[0].mxu0
        %v449 = vadd.f32 %v362, %v448
        %v450 = vpop.f32.mrb[0].mxu0
        %v451 = vadd.f32 %v366, %v450
        %452 = vdwg.mxu0
        %v453 = vmax.f32 %v443, 0.0
        %v454 = vmax.f32 %v445, 0.0
        %v455 = vmax.f32 %v449, 0.0
        %v456 = vmax.f32 %v451, 0.0
        %v457 = vld [vmem:[%s3] sm:$0xff]
        %v458 = vld [vmem:[%s3 + $0x8] sm:$0xff]
        %v459 = vld [vmem:[%s3 + $0x10] sm:$0xff]
        %v460 = vld [vmem:[%s3 + $0x18] sm:$0xff]
        %v461 = vld [vmem:[%s3 + $0x20] sm:$0xff]
        %v462 = vld [vmem:[%s3 + $0x28] sm:$0xff]
        %v463 = vld [vmem:[%s3 + $0x30] sm:$0xff]
        %v464 = vld [vmem:[%s3 + $0x38] sm:$0xff]
        %v465 = vld [vmem:[%s3 + $0x40] sm:$0xff]
        %v466 = vld [vmem:[%s3 + $0x48] sm:$0xff]
        %v467 = vld [vmem:[%s3 + $0x50] sm:$0xff]
        %v468 = vld [vmem:[%s3 + $0x58] sm:$0xff]
        %v469 = vld [vmem:[%s3 + $0x60] sm:$0xff]
        %v470 = vld [vmem:[%s3 + $0x68] sm:$0xff]
        %v471 = vld [vmem:[%s3 + $0x70] sm:$0xff]
        %v472 = vld [vmem:[%s3 + $0x78] sm:$0xff]
        %v473 = vld [vmem:[%s3 + $0x80] sm:$0xff]
        %v474 = vld [vmem:[%s3 + $0x88] sm:$0xff]
        %v475 = vld [vmem:[%s3 + $0x90] sm:$0xff]
        %v476 = vld [vmem:[%s3 + $0x98] sm:$0xff]
        %v477 = vld [vmem:[%s3 + $0xa0] sm:$0xff]
        %v478 = vld [vmem:[%s3 + $0xa8] sm:$0xff]
        %v479 = vld [vmem:[%s3 + $0xb0] sm:$0xff]
        %v480 = vld [vmem:[%s3 + $0xb8] sm:$0xff]
        %v481 = vld [vmem:[%s3 + $0xc0] sm:$0xff]
        %v482 = vld [vmem:[%s3 + $0xc8] sm:$0xff]
        %v483 = vld [vmem:[%s3 + $0xd0] sm:$0xff]
        %v484 = vld [vmem:[%s3 + $0xd8] sm:$0xff]
        %v485 = vld [vmem:[%s3 + $0xe0] sm:$0xff]
        %v486 = vld [vmem:[%s3 + $0xe8] sm:$0xff]
        %v487 = vld [vmem:[%s3 + $0xf0] sm:$0xff]
        %v488 = vld [vmem:[%s3 + $0xf8] sm:$0xff]
        %v489 = vld [vmem:[%s3 + $0x100] sm:$0xff]
        %v490 = vld [vmem:[%s3 + $0x108] sm:$0xff]
        %v491 = vld [vmem:[%s3 + $0x110] sm:$0xff]
        %v492 = vld [vmem:[%s3 + $0x118] sm:$0xff]
        %v493 = vld [vmem:[%s3 + $0x120] sm:$0xff]
        %v494 = vld [vmem:[%s3 + $0x128] sm:$0xff]
        %v495 = vld [vmem:[%s3 + $0x130] sm:$0xff]
        %v496 = vld [vmem:[%s3 + $0x138] sm:$0xff]
        %v497 = vld [vmem:[%s3 + $0x140] sm:$0xff]
        %v498 = vld [vmem:[%s3 + $0x148] sm:$0xff]
        %v499 = vld [vmem:[%s3 + $0x150] sm:$0xff]
        %v500 = vld [vmem:[%s3 + $0x158] sm:$0xff]
        %v501 = vld [vmem:[%s3 + $0x160] sm:$0xff]
        %v502 = vld [vmem:[%s3 + $0x168] sm:$0xff]
        %v503 = vld [vmem:[%s3 + $0x170] sm:$0xff]
        %v504 = vld [vmem:[%s3 + $0x178] sm:$0xff]
        %v505 = vld [vmem:[%s3 + $0x180] sm:$0xff]
        %v506 = vld [vmem:[%s3 + $0x188] sm:$0xff]
        %v507 = vld [vmem:[%s3 + $0x190] sm:$0xff]
        %v508 = vld [vmem:[%s3 + $0x198] sm:$0xff]
        %v509 = vld [vmem:[%s3 + $0x1a0] sm:$0xff]
        %v510 = vld [vmem:[%s3 + $0x1a8] sm:$0xff]
        %v511 = vld [vmem:[%s3 + $0x1b0] sm:$0xff]
        %v512 = vld [vmem:[%s3 + $0x1b8] sm:$0xff]
        %v513 = vld [vmem:[%s3 + $0x1c0] sm:$0xff]
        %v514 = vld [vmem:[%s3 + $0x1c8] sm:$0xff]
        %v515 = vld [vmem:[%s3 + $0x1d0] sm:$0xff]
        %v516 = vld [vmem:[%s3 + $0x1d8] sm:$0xff]
        %v517 = vld [vmem:[%s3 + $0x1e0] sm:$0xff]
        %v518 = vld [vmem:[%s3 + $0x1e8] sm:$0xff]
        %v519 = vld [vmem:[%s3 + $0x1f0] sm:$0xff]
        %v520 = vld [vmem:[%s3 + $0x1f8] sm:$0xff]
        %v521 = vld [vmem:[%s4] sm:$0x3]
        %v523 = vlaneseq
        %v524 = vshrl.u32 %v523, 7
        %v525 = vsub.s32 0, %v524
        %v526 = vrot.slane %v521, %v525
        %v527 = vlaneseq
        %v528 = vshrl.u32 %v527, 7
        %v529 = vsub.s32 1, %v528
        %v530 = vrot.slane %v521, %v529
        %533 = vmatprep.subr.mxu0 %v458
        %534 = vmatpush1.msra.mxu0 %v457
        %535 = vmatprep.subr.mxu0 %v460
        %536 = vmatpush1.msra.mxu0 %v459
        %537 = vmatprep.subr.mxu0 %v462
        %538 = vmatpush1.msra.mxu0 %v461
        %539 = vmatprep.subr.mxu0 %v464
        %540 = vmatpush1.msra.mxu0 %v463
        %541 = vmatprep.subr.mxu0 %v466
        %542 = vmatpush1.msra.mxu0 %v465
        %543 = vmatprep.subr.mxu0 %v468
        %544 = vmatpush1.msra.mxu0 %v467
        %545 = vmatprep.subr.mxu0 %v470
        %546 = vmatpush1.msra.mxu0 %v469
        %547 = vmatprep.subr.mxu0 %v472
        %548 = vmatpush1.msra.mxu0 %v471
        %549 = vmatprep.subr.mxu0 %v474
        %550 = vmatpush1.msra.mxu0 %v473
        %551 = vmatprep.subr.mxu0 %v476
        %552 = vmatpush1.msra.mxu0 %v475
        %553 = vmatprep.subr.mxu0 %v478
        %554 = vmatpush1.msra.mxu0 %v477
        %555 = vmatprep.subr.mxu0 %v480
        %556 = vmatpush1.msra.mxu0 %v479
        %557 = vmatprep.subr.mxu0 %v482
        %558 = vmatpush1.msra.mxu0 %v481
        %559 = vmatprep.subr.mxu0 %v484
        %560 = vmatpush1.msra.mxu0 %v483
        %561 = vmatprep.subr.mxu0 %v486
        %562 = vmatpush1.msra.mxu0 %v485
        %563 = vmatprep.subr.mxu0 %v488
        %564 = vmatpush1.msra.mxu0 %v487
        %565 = vmatprep.subr.mxu0 %v490
        %566 = vmatpush1.msra.mxu0 %v489
        %567 = vmatprep.subr.mxu0 %v492
        %568 = vmatpush1.msra.mxu0 %v491
        %569 = vmatprep.subr.mxu0 %v494
        %570 = vmatpush1.msra.mxu0 %v493
        %571 = vmatprep.subr.mxu0 %v496
        %572 = vmatpush1.msra.mxu0 %v495
        %573 = vmatprep.subr.mxu0 %v498
        %574 = vmatpush1.msra.mxu0 %v497
        %575 = vmatprep.subr.mxu0 %v500
        %576 = vmatpush1.msra.mxu0 %v499
        %577 = vmatprep.subr.mxu0 %v502
        %578 = vmatpush1.msra.mxu0 %v501
        %579 = vmatprep.subr.mxu0 %v504
        %580 = vmatpush1.msra.mxu0 %v503
        %581 = vmatprep.subr.mxu0 %v506
        %582 = vmatpush1.msra.mxu0 %v505
        %583 = vmatprep.subr.mxu0 %v508
        %584 = vmatpush1.msra.mxu0 %v507
        %585 = vmatprep.subr.mxu0 %v510
        %586 = vmatpush1.msra.mxu0 %v509
        %587 = vmatprep.subr.mxu0 %v512
        %588 = vmatpush1.msra.mxu0 %v511
        %589 = vmatprep.subr.mxu0 %v514
        %590 = vmatpush1.msra.mxu0 %v513
        %591 = vmatprep.subr.mxu0 %v516
        %592 = vmatpush1.msra.mxu0 %v515
        %593 = vmatprep.subr.mxu0 %v518
        %594 = vmatpush1.msra.mxu0 %v517
        %595 = vmatprep.subr.mxu0 %v520
        %596 = vmatpush1.msra.mxu0 %v519
        %597 = vmatprep.mubr.f32.mxu0 %v454
        %598 = vmatmul.mubr.f32.gmra.mrb[0].mxu0 %v453
        %v599 = vpop.f32.mrb[0].mxu0
        %v600 = vadd.f32 %v526, %v599
        %v601 = vpop.f32.mrb[0].mxu0
        %v602 = vadd.f32 %v530, %v601
        %603 = vmatprep.mubr.f32.mxu0 %v456
        %604 = vmatmul.mubr.f32.gmra.mrb[0].mxu0 %v455
        %v605 = vpop.f32.mrb[0].mxu0
        %v606 = vadd.f32 %v526, %v605
        %v607 = vpop.f32.mrb[0].mxu0
        %v608 = vadd.f32 %v530, %v607
        %609 = vdwg.mxu0
        %v610 = vmax.f32 %v600, 0.0
        %v611 = vmax.f32 %v602, 0.0
        %v612 = vmax.f32 %v606, 0.0
        %v613 = vmax.f32 %v608, 0.0
        %v614 = vld [vmem:[%s5] sm:$0xff]
        %v615 = vld [vmem:[%s5 + $0x8] sm:$0xff]
        %v616 = vld [vmem:[%s5 + $0x10] sm:$0xff]
        %v617 = vld [vmem:[%s5 + $0x18] sm:$0xff]
        %v618 = vld [vmem:[%s5 + $0x20] sm:$0xff]
        %v619 = vld [vmem:[%s5 + $0x28] sm:$0xff]
        %v620 = vld [vmem:[%s5 + $0x30] sm:$0xff]
        %v621 = vld [vmem:[%s5 + $0x38] sm:$0xff]
        %v622 = vld [vmem:[%s5 + $0x40] sm:$0xff]
        %v623 = vld [vmem:[%s5 + $0x48] sm:$0xff]
        %v624 = vld [vmem:[%s5 + $0x50] sm:$0xff]
        %v625 = vld [vmem:[%s5 + $0x58] sm:$0xff]
        %v626 = vld [vmem:[%s5 + $0x60] sm:$0xff]
        %v627 = vld [vmem:[%s5 + $0x68] sm:$0xff]
        %v628 = vld [vmem:[%s5 + $0x70] sm:$0xff]
        %v629 = vld [vmem:[%s5 + $0x78] sm:$0xff]
        %v630 = vld [vmem:[%s5 + $0x80] sm:$0xff]
        %v631 = vld [vmem:[%s5 + $0x88] sm:$0xff]
        %v632 = vld [vmem:[%s5 + $0x90] sm:$0xff]
        %v633 = vld [vmem:[%s5 + $0x98] sm:$0xff]
        %v634 = vld [vmem:[%s5 + $0xa0] sm:$0xff]
        %v635 = vld [vmem:[%s5 + $0xa8] sm:$0xff]
        %v636 = vld [vmem:[%s5 + $0xb0] sm:$0xff]
        %v637 = vld [vmem:[%s5 + $0xb8] sm:$0xff]
        %v638 = vld [vmem:[%s5 + $0xc0] sm:$0xff]
        %v639 = vld [vmem:[%s5 + $0xc8] sm:$0xff]
        %v640 = vld [vmem:[%s5 + $0xd0] sm:$0xff]
        %v641 = vld [vmem:[%s5 + $0xd8] sm:$0xff]
        %v642 = vld [vmem:[%s5 + $0xe0] sm:$0xff]
        %v643 = vld [vmem:[%s5 + $0xe8] sm:$0xff]
        %v644 = vld [vmem:[%s5 + $0xf0] sm:$0xff]
        %v645 = vld [vmem:[%s5 + $0xf8] sm:$0xff]
        %v646 = vld [vmem:[%s6] sm:$0x1]
        %v648 = vlaneseq
        %v649 = vshrl.u32 %v648, 7
        %v650 = vsub.s32 0, %v649
        %v651 = vrot.slane %v646, %v650
        %653 = vmatprep.subr.mxu0 0.0
        %654 = vmatpush1.msra.mxu0 %v614
        %655 = vmatprep.subr.mxu0 0.0
        %656 = vmatpush1.msra.mxu0 %v615
        %657 = vmatprep.subr.mxu0 0.0
        %658 = vmatpush1.msra.mxu0 %v616
        %659 = vmatprep.subr.mxu0 0.0
        %660 = vmatpush1.msra.mxu0 %v617
        %661 = vmatprep.subr.mxu0 0.0
        %662 = vmatpush1.msra.mxu0 %v618
        %663 = vmatprep.subr.mxu0 0.0
        %664 = vmatpush1.msra.mxu0 %v619
        %665 = vmatprep.subr.mxu0 0.0
        %666 = vmatpush1.msra.mxu0 %v620
        %667 = vmatprep.subr.mxu0 0.0
        %668 = vmatpush1.msra.mxu0 %v621
        %669 = vmatprep.subr.mxu0 0.0
        %670 = vmatpush1.msra.mxu0 %v622
        %671 = vmatprep.subr.mxu0 0.0
        %672 = vmatpush1.msra.mxu0 %v623
        %673 = vmatprep.subr.mxu0 0.0
        %674 = vmatpush1.msra.mxu0 %v624
        %675 = vmatprep.subr.mxu0 0.0
        %676 = vmatpush1.msra.mxu0 %v625
        %677 = vmatprep.subr.mxu0 0.0
        %678 = vmatpush1.msra.mxu0 %v626
        %679 = vmatprep.subr.mxu0 0.0
        %680 = vmatpush1.msra.mxu0 %v627
        %681 = vmatprep.subr.mxu0 0.0
        %682 = vmatpush1.msra.mxu0 %v628
        %683 = vmatprep.subr.mxu0 0.0
        %684 = vmatpush1.msra.mxu0 %v629
        %685 = vmatprep.subr.mxu0 0.0
        %686 = vmatpush1.msra.mxu0 %v630
        %687 = vmatprep.subr.mxu0 0.0
        %688 = vmatpush1.msra.mxu0 %v631
        %689 = vmatprep.subr.mxu0 0.0
        %690 = vmatpush1.msra.mxu0 %v632
        %691 = vmatprep.subr.mxu0 0.0
        %692 = vmatpush1.msra.mxu0 %v633
        %693 = vmatprep.subr.mxu0 0.0
        %694 = vmatpush1.msra.mxu0 %v634
        %695 = vmatprep.subr.mxu0 0.0
        %696 = vmatpush1.msra.mxu0 %v635
        %697 = vmatprep.subr.mxu0 0.0
        %698 = vmatpush1.msra.mxu0 %v636
        %699 = vmatprep.subr.mxu0 0.0
        %700 = vmatpush1.msra.mxu0 %v637
        %701 = vmatprep.subr.mxu0 0.0
        %702 = vmatpush1.msra.mxu0 %v638
        %703 = vmatprep.subr.mxu0 0.0
        %704 = vmatpush1.msra.mxu0 %v639
        %705 = vmatprep.subr.mxu0 0.0
        %706 = vmatpush1.msra.mxu0 %v640
        %707 = vmatprep.subr.mxu0 0.0
        %708 = vmatpush1.msra.mxu0 %v641
        %709 = vmatprep.subr.mxu0 0.0
        %710 = vmatpush1.msra.mxu0 %v642
        %711 = vmatprep.subr.mxu0 0.0
        %712 = vmatpush1.msra.mxu0 %v643
        %713 = vmatprep.subr.mxu0 0.0
        %714 = vmatpush1.msra.mxu0 %v644
        %715 = vmatprep.subr.mxu0 0.0
        %716 = vmatpush1.msra.mxu0 %v645
        %717 = vmatprep.mubr.f32.mxu0 %v611
        %718 = vmatmul.mubr.f32.gmra.mrb[0].mxu0 %v610
        %v719 = vpop.f32.mrb[0].mxu0
        %v720 = vadd.f32 %v651, %v719
        %v721 = vpop.f32.mrb[0].mxu0
        %722 = vmatprep.mubr.f32.mxu0 %v613
        %723 = vmatmul.mubr.f32.gmra.mrb[0].mxu0 %v612
        %v724 = vpop.f32.mrb[0].mxu0
        %v725 = vadd.f32 %v651, %v724
        %v726 = vpop.f32.mrb[0].mxu0
        %727 = vdwg.mxu0
        %v728 = vld [vmem:[#allocation2] sm:$0xff]
        %v729 = vld [vmem:[#allocation2 + $0x8] sm:$0xff]
        %v730 = vld [vmem:[#allocation2 + $0x10] sm:$0xff]
        %v731 = vld [vmem:[#allocation2 + $0x18] sm:$0xff]
        %v732 = vld [vmem:[%s8] sm:$0x1]
        %v734 = vlaneseq
        %v735 = vshrl.u32 %v734, 7
        %v736 = vsub.s32 0, %v735
        %v737 = vrot.slane %v732, %v736
        %vm739 = vcmask 261120
        %v741 = vsel %vm739, %v720, 0
        %v744 = vsel %vm739, %v725, 0
        %746 = vmatprep.subr.mxu0 0.0
        %747 = vmatpush1.msra.mxu0 %v728
        %748 = vmatprep.subr.mxu0 0.0
        %749 = vmatpush1.msra.mxu0 %v729
        %750 = vmatprep.subr.mxu0 0.0
        %751 = vmatpush1.msra.mxu0 %v730
        %752 = vmatprep.subr.mxu0 0.0
        %753 = vmatpush1.msra.mxu0 %v731
        %754 = vmatprep.subr.mxu0 0.0
        %755 = vmatpush1.msra.mxu0 0.0
        %756 = vmatprep.subr.mxu0 0.0
        %757 = vmatpush1.msra.mxu0 0.0
        %758 = vmatprep.subr.mxu0 0.0
        %759 = vmatpush1.msra.mxu0 0.0
        %760 = vmatprep.subr.mxu0 0.0
        %761 = vmatpush1.msra.mxu0 0.0
        %762 = vmatprep.subr.mxu0 0.0
        %763 = vmatpush1.msra.mxu0 0.0
        %764 = vmatprep.subr.mxu0 0.0
        %765 = vmatpush1.msra.mxu0 0.0
        %766 = vmatprep.subr.mxu0 0.0
        %767 = vmatpush1.msra.mxu0 0.0
        %768 = vmatprep.subr.mxu0 0.0
        %769 = vmatpush1.msra.mxu0 0.0
        %770 = vmatprep.subr.mxu0 0.0
        %771 = vmatpush1.msra.mxu0 0.0
        %772 = vmatprep.subr.mxu0 0.0
        %773 = vmatpush1.msra.mxu0 0.0
        %774 = vmatprep.subr.mxu0 0.0
        %775 = vmatpush1.msra.mxu0 0.0
        %776 = vmatprep.subr.mxu0 0.0
        %777 = vmatpush1.msra.mxu0 0.0
        %778 = vmatprep.subr.mxu0 0.0
        %779 = vmatpush1.msra.mxu0 0.0
        %780 = vmatprep.subr.mxu0 0.0
        %781 = vmatpush1.msra.mxu0 0.0
        %782 = vmatprep.subr.mxu0 0.0
        %783 = vmatpush1.msra.mxu0 0.0
        %784 = vmatprep.subr.mxu0 0.0
        %785 = vmatpush1.msra.mxu0 0.0
        %786 = vmatprep.subr.mxu0 0.0
        %787 = vmatpush1.msra.mxu0 0.0
        %788 = vmatprep.subr.mxu0 0.0
        %789 = vmatpush1.msra.mxu0 0.0
        %790 = vmatprep.subr.mxu0 0.0
        %791 = vmatpush1.msra.mxu0 0.0
        %792 = vmatprep.subr.mxu0 0.0
        %793 = vmatpush1.msra.mxu0 0.0
        %794 = vmatprep.subr.mxu0 0.0
        %795 = vmatpush1.msra.mxu0 0.0
        %796 = vmatprep.subr.mxu0 0.0
        %797 = vmatpush1.msra.mxu0 0.0
        %798 = vmatprep.subr.mxu0 0.0
        %799 = vmatpush1.msra.mxu0 0.0
        %800 = vmatprep.subr.mxu0 0.0
        %801 = vmatpush1.msra.mxu0 0.0
        %802 = vmatprep.subr.mxu0 0.0
        %803 = vmatpush1.msra.mxu0 0.0
        %804 = vmatprep.subr.mxu0 0.0
        %805 = vmatpush1.msra.mxu0 0.0
        %806 = vmatprep.subr.mxu0 0.0
        %807 = vmatpush1.msra.mxu0 0.0
        %808 = vmatprep.subr.mxu0 0.0
        %809 = vmatpush1.msra.mxu0 0.0
        %810 = vmatprep.mubr.f32.mxu0 0.0
        %811 = vmatmul.mubr.f32.gmra.mrb[0].mxu0 %v741
        %v812 = vpop.f32.mrb[0].mxu0
        %v813 = vadd.f32 %v737, %v812
        %v814 = vpop.f32.mrb[0].mxu0
        %815 = vmatprep.mubr.f32.mxu0 0.0
        %816 = vmatmul.mubr.f32.gmra.mrb[0].mxu0 %v744
        %v817 = vpop.f32.mrb[0].mxu0
        %v818 = vadd.f32 %v737, %v817
        %v819 = vpop.f32.mrb[0].mxu0
        %820 = vdwg.mxu0
        %vm821 = vcmask 785408
        %822 = vst.msk [vmem:[%s349] sm:$0xff] %vm821, %v813
        %823 = vst.msk [vmem:[%s349 + $0x8] sm:$0xff] %vm821, %v818
        %s824 = smul.u32 2, %s21
        %p825 = scmp.lt.s32.totalorder %s824, 7
        %s826 = scalar_select %p825, %s824, 7
        %s827 = smul.addr %s826, 8
        %s828 = scalar_lea.vmem %s9, %s827
        // Predicated region
        $region61: #{adaptive_graph_learner.3} parent=55 // pred_check
          %p829 = pneg %p233
        $region62: #{adaptive_graph_learner.3} parent=55 // pred_check_branch
          %831 = sbr.rel (%p829) target = $region64
        $region63: #{adaptive_graph_learner.3} parent=55 // pred_region
          %s832 = smul.u32 2, %s21
        $region64: #{adaptive_graph_learner.3} parent=55 // pred_fallthru
          _
      $region56: #{adaptive_graph_learner.3} parent=5 // pred_fallthru
        _
      %p833 = scmp.le.s32.totalorder 2, %s16
      // Predicated region
      $region65: #{adaptive_graph_learner.3} parent=5 // pred_check
        %p834 = pneg %p833
      $region66: #{adaptive_graph_learner.3} parent=5 // pred_check_branch
        %836 = sbr.rel (%p834) target = $region68
      $region67: #{adaptive_graph_learner.3} parent=5 // pred_region
        %s837 = ssub.s32 %s16, 2
        // Predicated region
        $region69: #{adaptive_graph_learner.3} parent=67 // pred_check
          %p838 = pneg %p239
        $region70: #{adaptive_graph_learner.3} parent=67 // pred_check_branch
          %840 = sbr.rel (%p838) target = $region72
        $region71: #{adaptive_graph_learner.3} parent=67 // pred_region
          %s841 = smul.u32 2, %s22
          %p842 = scmp.lt.s32.totalorder %s841, 7
          %s843 = scalar_select %p842, %s841, 7
          %s844 = smul.addr %s843, 8
          %s845 = scalar_lea.vmem %s9, %s844
        $region72: #{adaptive_graph_learner.3} parent=67 // pred_fallthru
          _
      $region68: #{adaptive_graph_learner.3} parent=5 // pred_fallthru
        _
    $region6: #{adaptive_graph_learner.3} parent=1 // loop_footer
      %s20 = sadd.s32 1, %s16
    $region7: #{adaptive_graph_learner.3} parent=1 // loop_footer_branch
      %15 = sbr.rel target = $region3
    $region8: #{adaptive_graph_learner.3} parent=1 // loop_exit
      _
    %846 = vsyncpa [#allocation3], 1
    %s847 = scalar_lea.sflag [#allocation3], 1
    %848 = vsyncpa %s847, 1

// kernel: adaptive_graph_learner.4
$region0: #{adaptive_graph_learner.4}
  #allocation0 [shape = 'u32[]', space=smem, size = 0x4, offset = 0x4, fixed_abs, tag = 'smem constant byte address 0x4 - core index']
  #allocation1 [shape = 'u32[144,128]{1,0:T(1,128)}', space=vmem, size = 0x12000, scoped, tag = 'internal scratch']
  %s0 = inlined_call_operand.vmem [shape: f32[64,96], index: 0, kind: input, shape index: {}]
  %s1 = inlined_call_operand.vmem [shape: f32[1,96], index: 1, kind: input, shape index: {}]
  %s2 = inlined_call_operand.vmem [shape: f32[1,96], index: 2, kind: input, shape index: {}]
  %s3 = inlined_call_operand.vmem [shape: f32[8,32], index: 3, kind: input, shape index: {}]
  %s4 = inlined_call_operand.vmem [shape: f32[32,32], index: 4, kind: input, shape index: {}]
  %s5 = inlined_call_operand.vmem [shape: f32[1,32], index: 5, kind: input, shape index: {}]
  %s6 = inlined_call_operand.vmem [shape: f32[64,32], index: 6, kind: output, shape index: {}]
  %s7 = sld [smem:[#allocation0]]
  $region57: #{adaptive_graph_learner.4} parent=0
    _
  %s9 = ssub.s32 1, %s7
  %s10 = scalar_select 0, %s9, %s7
  loop: start=0, step=1, limit=6
  $region2: #{adaptive_graph_learner.4} parent=0 // loop_pre_header
    _
  $region3: #{adaptive_graph_learner.4} parent=0 // loop_header
    %s12 = sphi 0, %s16
    %p13 = scmp.ge.s32.totalorder %s12, 6
    %s22 = sphi 0, %s24
    %s25 = sphi 0, %s22
    %s26 = sphi 0, %s25
    %s42 = sphi 0, %s26
    %s46 = sphi 0, %s46
    %s48 = sphi 0, %s46
    %s49 = sphi 0, %s48
    %s63 = sphi 0, %s49
    %s67 = sphi 0, %s67
    %s69 = sphi 0, %s67
    %s70 = sphi 0, %s69
    %s84 = sphi 0, %s70
    %s88 = sphi 0, %s88
    %s90 = sphi 0, %s88
    %s91 = sphi 0, %s90
    %s105 = sphi 0, %s91
    %s109 = sphi 0, %s109
    %s111 = sphi 0, %s109
    %s112 = sphi 0, %s111
    %s126 = sphi 0, %s112
    %s130 = sphi 0, %s130
    %s132 = sphi 0, %s130
    %s133 = sphi 0, %s132
    %s147 = sphi 0, %s133
    %s153 = sphi 0, %s155
    %s156 = sphi 0, %s153
    %s157 = sphi 0, %s156
    %s173 = sphi 0, %s157
  $region4: #{adaptive_graph_learner.4} parent=0 // loop_header_branch
    %15 = sbr.rel (%p13) target = $region8
  $region5: #{adaptive_graph_learner.4} parent=0 // loop_body
    %s17 = ssub.s32 %s12, 1
    %s18 = ssub.s32 %s12, 2
    %s19 = sadd.s32 %s12, 1
    %s20 = ssub.s32 %s12, %s19
    %p21 = scmp.eq.s32.totalorder %s20, 0
    %s23 = sadd.s32 %s22, 1
    %s24 = scalar_select %p21, %s22, %s23
    %p27 = pneg %p21
    %p28 = scmp.eq.s32.totalorder %s12, 3
    %p29 = por %p27, %p28
    %p30 = scmp.ne.s32.totalorder %s22, %s25
    %p31 = scmp.eq.s32.totalorder %s12, 0
    %p32 = por %p30, %p31
    %p33 = scmp.ne.s32.totalorder %s22, %s25
    %p34 = scmp.eq.s32.totalorder %s17, 3
    %p35 = por %p33, %p34
    %p36 = scmp.ne.s32.totalorder %s25, %s26
    %p37 = scmp.eq.s32.totalorder %s17, 0
    %p38 = por %p36, %p37
    %p39 = scmp.ne.s32.totalorder %s25, %s26
    %p40 = scmp.eq.s32.totalorder %s18, 3
    %p41 = por %p39, %p40
    %p43 = scmp.ne.s32.totalorder %s26, %s42
    %p44 = scmp.eq.s32.totalorder %s18, 0
    %p45 = por %p43, %p44
    %s47 = sadd.s32 %s46, 1
    %p50 = scmp.eq.s32.totalorder %s12, 3
    %p51 = scmp.ne.s32.totalorder %s46, %s48
    %p52 = scmp.eq.s32.totalorder %s12, 0
    %p53 = por %p51, %p52
    %p54 = scmp.ne.s32.totalorder %s46, %s48
    %p55 = scmp.eq.s32.totalorder %s17, 3
    %p56 = por %p54, %p55
    %p57 = scmp.ne.s32.totalorder %s48, %s49
    %p58 = scmp.eq.s32.totalorder %s17, 0
    %p59 = por %p57, %p58
    %p60 = scmp.ne.s32.totalorder %s48, %s49
    %p61 = scmp.eq.s32.totalorder %s18, 3
    %p62 = por %p60, %p61
    %p64 = scmp.ne.s32.totalorder %s49, %s63
    %p65 = scmp.eq.s32.totalorder %s18, 0
    %p66 = por %p64, %p65
    %s68 = sadd.s32 %s67, 1
    %p71 = scmp.eq.s32.totalorder %s12, 3
    %p72 = scmp.ne.s32.totalorder %s67, %s69
    %p73 = scmp.eq.s32.totalorder %s12, 0
    %p74 = por %p72, %p73
    %p75 = scmp.ne.s32.totalorder %s67, %s69
    %p76 = scmp.eq.s32.totalorder %s17, 3
    %p77 = por %p75, %p76
    %p78 = scmp.ne.s32.totalorder %s69, %s70
    %p79 = scmp.eq.s32.totalorder %s17, 0
    %p80 = por %p78, %p79
    %p81 = scmp.ne.s32.totalorder %s69, %s70
    %p82 = scmp.eq.s32.totalorder %s18, 3
    %p83 = por %p81, %p82
    %p85 = scmp.ne.s32.totalorder %s70, %s84
    %p86 = scmp.eq.s32.totalorder %s18, 0
    %p87 = por %p85, %p86
    %s89 = sadd.s32 %s88, 1
    %p92 = scmp.eq.s32.totalorder %s12, 3
    %p93 = scmp.ne.s32.totalorder %s88, %s90
    %p94 = scmp.eq.s32.totalorder %s12, 0
    %p95 = por %p93, %p94
    %p96 = scmp.ne.s32.totalorder %s88, %s90
    %p97 = scmp.eq.s32.totalorder %s17, 3
    %p98 = por %p96, %p97
    %p99 = scmp.ne.s32.totalorder %s90, %s91
    %p100 = scmp.eq.s32.totalorder %s17, 0
    %p101 = por %p99, %p100
    %p102 = scmp.ne.s32.totalorder %s90, %s91
    %p103 = scmp.eq.s32.totalorder %s18, 3
    %p104 = por %p102, %p103
    %p106 = scmp.ne.s32.totalorder %s91, %s105
    %p107 = scmp.eq.s32.totalorder %s18, 0
    %p108 = por %p106, %p107
    %s110 = sadd.s32 %s109, 1
    %p113 = scmp.eq.s32.totalorder %s12, 3
    %p114 = scmp.ne.s32.totalorder %s109, %s111
    %p115 = scmp.eq.s32.totalorder %s12, 0
    %p116 = por %p114, %p115
    %p117 = scmp.ne.s32.totalorder %s109, %s111
    %p118 = scmp.eq.s32.totalorder %s17, 3
    %p119 = por %p117, %p118
    %p120 = scmp.ne.s32.totalorder %s111, %s112
    %p121 = scmp.eq.s32.totalorder %s17, 0
    %p122 = por %p120, %p121
    %p123 = scmp.ne.s32.totalorder %s111, %s112
    %p124 = scmp.eq.s32.totalorder %s18, 3
    %p125 = por %p123, %p124
    %p127 = scmp.ne.s32.totalorder %s112, %s126
    %p128 = scmp.eq.s32.totalorder %s18, 0
    %p129 = por %p127, %p128
    %s131 = sadd.s32 %s130, 1
    %p134 = scmp.eq.s32.totalorder %s12, 3
    %p135 = scmp.ne.s32.totalorder %s130, %s132
    %p136 = scmp.eq.s32.totalorder %s12, 0
    %p137 = por %p135, %p136
    %p138 = scmp.ne.s32.totalorder %s130, %s132
    %p139 = scmp.eq.s32.totalorder %s17, 3
    %p140 = por %p138, %p139
    %p141 = scmp.ne.s32.totalorder %s132, %s133
    %p142 = scmp.eq.s32.totalorder %s17, 0
    %p143 = por %p141, %p142
    %p144 = scmp.ne.s32.totalorder %s132, %s133
    %p145 = scmp.eq.s32.totalorder %s18, 3
    %p146 = por %p144, %p145
    %p148 = scmp.ne.s32.totalorder %s133, %s147
    %p149 = scmp.eq.s32.totalorder %s18, 0
    %p150 = por %p148, %p149
    %s151 = ssub.s32 %s12, %s19
    %p152 = scmp.eq.s32.totalorder %s151, 0
    %s154 = sadd.s32 %s153, 1
    %s155 = scalar_select %p152, %s153, %s154
    %p158 = pneg %p152
    %p159 = scmp.eq.s32.totalorder %s12, 3
    %p160 = por %p158, %p159
    %p161 = scmp.ne.s32.totalorder %s153, %s156
    %p162 = scmp.eq.s32.totalorder %s12, 0
    %p163 = por %p161, %p162
    %p164 = scmp.ne.s32.totalorder %s153, %s156
    %p165 = scmp.eq.s32.totalorder %s17, 3
    %p166 = por %p164, %p165
    %p167 = scmp.ne.s32.totalorder %s156, %s157
    %p168 = scmp.eq.s32.totalorder %s17, 0
    %p169 = por %p167, %p168
    %p170 = scmp.ne.s32.totalorder %s156, %s157
    %p171 = scmp.eq.s32.totalorder %s18, 3
    %p172 = por %p170, %p171
    %p174 = scmp.ne.s32.totalorder %s157, %s173
    %p175 = scmp.eq.s32.totalorder %s18, 0
    %p176 = por %p174, %p175
    %p177 = scmp.le.s32.totalorder 1, %s12
    %p178 = scmp.lt.s32.totalorder %s12, 5
    %p179 = pnand %p177, %p178
    %p180 = pneg %p179
    // Predicated region
    $region9: #{adaptive_graph_learner.4} parent=5 // pred_check
      _
    $region10: #{adaptive_graph_learner.4} parent=5 // pred_check_branch
      %182 = sbr.rel (%p179) target = $region12
    $region11: #{adaptive_graph_learner.4} parent=5 // pred_region
      %s183 = ssub.s32 %s12, 1
      // Predicated region
      $region13: #{adaptive_graph_learner.4} parent=11 // pred_check
        %p184 = pneg %p59
      $region14: #{adaptive_graph_learner.4} parent=11 // pred_check_branch
        %186 = sbr.rel (%p184) target = $region16
      $region15: #{adaptive_graph_learner.4} parent=11 // pred_region
        _
      $region16: #{adaptive_graph_learner.4} parent=11 // pred_fallthru
        _
      // Predicated region
      $region17: #{adaptive_graph_learner.4} parent=11 // pred_check
        %p187 = pneg %p80
      $region18: #{adaptive_graph_learner.4} parent=11 // pred_check_branch
        %189 = sbr.rel (%p187) target = $region20
      $region19: #{adaptive_graph_learner.4} parent=11 // pred_region
        _
      $region20: #{adaptive_graph_learner.4} parent=11 // pred_fallthru
        _
      // Predicated region
      $region21: #{adaptive_graph_learner.4} parent=11 // pred_check
        %p190 = pneg %p101
      $region22: #{adaptive_graph_learner.4} parent=11 // pred_check_branch
        %192 = sbr.rel (%p190) target = $region24
      $region23: #{adaptive_graph_learner.4} parent=11 // pred_region
        _
      $region24: #{adaptive_graph_learner.4} parent=11 // pred_fallthru
        _
      // Predicated region
      $region25: #{adaptive_graph_learner.4} parent=11 // pred_check
        %p193 = pneg %p122
      $region26: #{adaptive_graph_learner.4} parent=11 // pred_check_branch
        %195 = sbr.rel (%p193) target = $region28
      $region27: #{adaptive_graph_learner.4} parent=11 // pred_region
        _
      $region28: #{adaptive_graph_learner.4} parent=11 // pred_fallthru
        _
      // Predicated region
      $region29: #{adaptive_graph_learner.4} parent=11 // pred_check
        %p196 = pneg %p143
      $region30: #{adaptive_graph_learner.4} parent=11 // pred_check_branch
        %198 = sbr.rel (%p196) target = $region32
      $region31: #{adaptive_graph_learner.4} parent=11 // pred_region
        _
      $region32: #{adaptive_graph_learner.4} parent=11 // pred_fallthru
        _
    $region12: #{adaptive_graph_learner.4} parent=5 // pred_fallthru
      _
    %p199 = scmp.lt.s32.totalorder %s12, 4
    // Predicated region
    $region33: #{adaptive_graph_learner.4} parent=5 // pred_check
      %p200 = pneg %p199
    $region34: #{adaptive_graph_learner.4} parent=5 // pred_check_branch
      %202 = sbr.rel (%p200) target = $region36
    $region35: #{adaptive_graph_learner.4} parent=5 // pred_region
      // Predicated region
      $region37: #{adaptive_graph_learner.4} parent=35 // pred_check
        %p203 = pneg %p32
      $region38: #{adaptive_graph_learner.4} parent=35 // pred_check_branch
        %205 = sbr.rel (%p203) target = $region40
      $region39: #{adaptive_graph_learner.4} parent=35 // pred_region
        %s206 = smul.u32 2, %s12
        %p207 = scmp.lt.s32.totalorder %s206, 7
        %s208 = scalar_select %p207, %s206, 7
        %s209 = smul.addr %s208, 8
        %s210 = scalar_lea.vmem %s0, %s209
        %s211 = smul.u32 2, %s12
      $region40: #{adaptive_graph_learner.4} parent=35 // pred_fallthru
        _
    $region36: #{adaptive_graph_learner.4} parent=5 // pred_fallthru
      _
    %p212 = scmp.le.s32.totalorder 1, %s12
    %p213 = scmp.lt.s32.totalorder %s12, 5
    %p214 = pnand %p212, %p213
    %p215 = pneg %p214
    // Predicated region
    $region41: #{adaptive_graph_learner.4} parent=5 // pred_check
      _
    $region42: #{adaptive_graph_learner.4} parent=5 // pred_check_branch
      %217 = sbr.rel (%p214) target = $region44
    $region43: #{adaptive_graph_learner.4} parent=5 // pred_region
      %s218 = ssub.s32 %s12, 1
      %s219 = smul.u32 2, %s17
      %p220 = scmp.lt.s32.totalorder %s219, 7
      %s221 = scalar_select %p220, %s219, 7
      %s222 = smul.addr %s221, 8
      %s223 = scalar_lea.vmem %s0, %s222
      %p224 = pneg %p38
      %p225 = pneg %p35
      %p226 = pneg %p59
      %p227 = pneg %p56
      %p228 = pneg %p80
      %p229 = pneg %p77
      %p230 = pneg %p101
      %p231 = pneg %p98
      %p232 = pneg %p122
      %p233 = pneg %p119
      %p234 = pneg %p143
      %p235 = pneg %p140
      %p236 = pneg %p169
      %p237 = pneg %p166
      %s238 = smul.u32 2, %s17
      %p239 = scmp.lt.s32.totalorder %s238, 7
      %s240 = scalar_select %p239, %s238, 7
      %s241 = smul.addr %s240, 8
      %s242 = scalar_lea.vmem %s6, %s241
      %s243 = smul.u32 2, %s17
      %p244 = scmp.lt.s32.totalorder %s243, 7
      %s245 = scalar_select %p244, %s243, 7
      %s246 = smul.addr %s245, 8
      %s247 = scalar_lea.vmem %s0, %s246
      %s248 = smul.u32 2, %s17
      %s249 = smul.u32 2, %s17
      %p250 = scmp.lt.s32.totalorder %s249, 7
      %s251 = scalar_select %p250, %s249, 7
      %s252 = smul.addr %s251, 8
      %s253 = scalar_lea.vmem %s6, %s252
      %s254 = smul.u32 2, %s17
      %v255 = vld [vmem:[%s247] sm:$0xff]
      %v256 = vld [vmem:[%s247 + $0x8] sm:$0xff]
      %v257 = vld [vmem:[%s1] sm:$0x1]
      %v259 = vlaneseq
      %v260 = vshrl.u32 %v259, 7
      %v261 = vsub.s32 0, %v260
      %v262 = vrot.slane %v257, %v261
      %v264 = vsub.f32 %v255, %v262
      %v265 = vsub.f32 %v256, %v262
      %v266 = vld [vmem:[%s2] sm:$0x1]
      %v268 = vlaneseq
      %v269 = vshrl.u32 %v268, 7
      %v270 = vsub.s32 0, %v269
      %v271 = vrot.slane %v266, %v270
      %v273 = vmul.f32 %v264, %v271
      %v274 = vmul.f32 %v265, %v271
      %v275 = vmax.f32 %v273, 0.0
      %v276 = vmax.f32 %v274, 0.0
      %v277 = vld [vmem:[%s3] sm:$0xff]
      %v279 = vcombine.high %v277, %v277
      %v281 = vunpack.c.l.s4 1966171168
      %v282 = vunpack.c.0.s8 %v281
      %v283 = vlaneseq
      %v284 = vshrl.u32 %v283, 7
      %v285 = vsub.s32 %v282, %v284
      %v286 = vrot.slane %v277, %v285
      %v288 = vunpack.c.l.s4 1966171168
      %v289 = vunpack.c.0.s8 %v288
      %v290 = vlaneseq
      %v291 = vshrl.u32 %v290, 7
      %v292 = vsub.s32 %v289, %v291
      %v293 = vrot.slane %v279, %v292
      %v294 = vcombine.high %v286, %v286
      %v295 = vcombine.high %v293, %v293
      %v297 = vunpack.c.l.s4 1966171168
      %v298 = vunpack.c.0.s8 %v297
      %v299 = vlaneseq
      %v300 = vshrl.u32 %v299, 7
      %v301 = vsub.s32 %v298, %v300
      %v302 = vrot.slane %v286, %v301
      %v304 = vunpack.c.l.s4 1966171168
      %v305 = vunpack.c.0.s8 %v304
      %v306 = vlaneseq
      %v307 = vshrl.u32 %v306, 7
      %v308 = vsub.s32 %v305, %v307
      %v309 = vrot.slane %v293, %v308
      %v311 = vunpack.c.l.s4 1966171168
      %v312 = vunpack.c.0.s8 %v311
      %v313 = vlaneseq
      %v314 = vshrl.u32 %v313, 7
      %v315 = vsub.s32 %v312, %v314
      %v316 = vrot.slane %v294, %v315
      %v318 = vunpack.c.l.s4 1966171168
      %v319 = vunpack.c.0.s8 %v318
      %v320 = vlaneseq
      %v321 = vshrl.u32 %v320, 7
      %v322 = vsub.s32 %v319, %v321
      %v323 = vrot.slane %v295, %v322
      %v324 = vcombine.high %v302, %v302
      %v325 = vcombine.high %v309, %v309
      %v326 = vcombine.high %v316, %v316
      %v327 = vcombine.high %v323, %v323
      %v328 = vlaneseq
      %v329 = vshrl.u32 %v328, 7
      %v330 = vsub.s32 0, %v329
      %v331 = vrot.slane %v302, %v330
      %v332 = vlaneseq
      %v333 = vshrl.u32 %v332, 7
      %v334 = vsub.s32 0, %v333
      %v335 = vrot.slane %v316, %v334
      %v336 = vlaneseq
      %v337 = vshrl.u32 %v336, 7
      %v338 = vsub.s32 0, %v337
      %v339 = vrot.slane %v324, %v338
      %v340 = vlaneseq
      %v341 = vshrl.u32 %v340, 7
      %v342 = vsub.s32 0, %v341
      %v343 = vrot.slane %v326, %v342
      %v344 = vlaneseq
      %v345 = vshrl.u32 %v344, 7
      %v346 = vsub.s32 0, %v345
      %v347 = vrot.slane %v309, %v346
      %v348 = vlaneseq
      %v349 = vshrl.u32 %v348, 7
      %v350 = vsub.s32 0, %v349
      %v351 = vrot.slane %v323, %v350
      %v352 = vlaneseq
      %v353 = vshrl.u32 %v352, 7
      %v354 = vsub.s32 0, %v353
      %v355 = vrot.slane %v325, %v354
      %v356 = vlaneseq
      %v357 = vshrl.u32 %v356, 7
      %v358 = vsub.s32 0, %v357
      %v359 = vrot.slane %v327, %v358
      %v368 = vmul.f32 %v275, %v331
      %v369 = vmul.f32 %v276, %v331
      %v370 = vmul.f32 %v275, %v335
      %v371 = vmul.f32 %v276, %v335
      %v372 = vmul.f32 %v275, %v339
      %v373 = vmul.f32 %v276, %v339
      %v374 = vmul.f32 %v275, %v343
      %v375 = vmul.f32 %v276, %v343
      %v376 = vmul.f32 %v275, %v347
      %v377 = vmul.f32 %v276, %v347
      %v378 = vmul.f32 %v275, %v351
      %v379 = vmul.f32 %v276, %v351
      %v380 = vmul.f32 %v275, %v355
      %v381 = vmul.f32 %v276, %v355
      %v382 = vmul.f32 %v275, %v359
      %v383 = vmul.f32 %v276, %v359
      %386 = vrot.lane.b32.xlu0 %v275, 96
      %v387 = vpop.permute.xlu0 %386
      %388 = vrot.lane.b32.xlu0 %v276, 96
      %v389 = vpop.permute.xlu0 %388
      %vm390 = vcmask 261120
      %v392 = vsel %vm390, %v368, 0
      %v395 = vsel %vm390, %v369, 0
      %v398 = vsel %vm390, %v370, 0
      %v401 = vsel %vm390, %v371, 0
      %v404 = vsel %vm390, %v372, 0
      %v407 = vsel %vm390, %v373, 0
      %v410 = vsel %vm390, %v374, 0
      %v413 = vsel %vm390, %v375, 0
      %v416 = vsel %vm390, %v376, 0
      %v419 = vsel %vm390, %v377, 0
      %v422 = vsel %vm390, %v378, 0
      %v425 = vsel %vm390, %v379, 0
      %v428 = vsel %vm390, %v380, 0
      %v431 = vsel %vm390, %v381, 0
      %v434 = vsel %vm390, %v382, 0
      %v437 = vsel %vm390, %v383, 0
      %v439 = vsel %vm390, %v387, 0
      %v441 = vsel %vm390, %v389, 0
      %443 = vmatprep.subr.mxu0 0.0
      %444 = vmatpush1.xpose.msra.mxu0 %v439
      %445 = vmatprep.subr.mxu0 0.0
      %446 = vmatpush1.xpose.msra.mxu0 %v441
      %447 = vmatprep.subr.mxu0 0.0
      %448 = vmatpush1.xpose.msra.mxu0 0.0
      %449 = vmatprep.subr.mxu0 0.0
      %450 = vmatpush1.xpose.msra.mxu0 0.0
      %451 = vmatprep.subr.mxu0 0.0
      %452 = vmatpush1.xpose.msra.mxu0 0.0
      %453 = vmatprep.subr.mxu0 0.0
      %454 = vmatpush1.xpose.msra.mxu0 0.0
      %455 = vmatprep.subr.mxu0 0.0
      %456 = vmatpush1.xpose.msra.mxu0 0.0
      %457 = vmatprep.subr.mxu0 0.0
      %458 = vmatpush1.xpose.msra.mxu0 0.0
      %459 = vmatprep.subr.mxu0 0.0
      %460 = vmatpush1.xpose.msra.mxu0 0.0
      %461 = vmatprep.subr.mxu0 0.0
      %462 = vmatpush1.xpose.msra.mxu0 0.0
      %463 = vmatprep.subr.mxu0 0.0
      %464 = vmatpush1.xpose.msra.mxu0 0.0
      %465 = vmatprep.subr.mxu0 0.0
      %466 = vmatpush1.xpose.msra.mxu0 0.0
      %467 = vmatprep.subr.mxu0 0.0
      %468 = vmatpush1.xpose.msra.mxu0 0.0
      %469 = vmatprep.subr.mxu0 0.0
      %470 = vmatpush1.xpose.msra.mxu0 0.0
      %471 = vmatprep.subr.mxu0 0.0
      %472 = vmatpush1.xpose.msra.mxu0 0.0
      %473 = vmatprep.subr.mxu0 0.0
      %474 = vmatpush1.xpose.msra.mxu0 0.0
      %475 = vmatprep.subr.mxu0 0.0
      %476 = vmatpush1.xpose.msra.mxu0 0.0
      %477 = vmatprep.subr.mxu0 0.0
      %478 = vmatpush1.xpose.msra.mxu0 0.0
      %479 = vmatprep.subr.mxu0 0.0
      %480 = vmatpush1.xpose.msra.mxu0 0.0
      %481 = vmatprep.subr.mxu0 0.0
      %482 = vmatpush1.xpose.msra.mxu0 0.0
      %483 = vmatprep.subr.mxu0 0.0
      %484 = vmatpush1.xpose.msra.mxu0 0.0
      %485 = vmatprep.subr.mxu0 0.0
      %486 = vmatpush1.xpose.msra.mxu0 0.0
      %487 = vmatprep.subr.mxu0 0.0
      %488 = vmatpush1.xpose.msra.mxu0 0.0
      %489 = vmatprep.subr.mxu0 0.0
      %490 = vmatpush1.xpose.msra.mxu0 0.0
      %491 = vmatprep.subr.mxu0 0.0
      %492 = vmatpush1.xpose.msra.mxu0 0.0
      %493 = vmatprep.subr.mxu0 0.0
      %494 = vmatpush1.xpose.msra.mxu0 0.0
      %495 = vmatprep.subr.mxu0 0.0
      %496 = vmatpush1.xpose.msra.mxu0 0.0
      %497 = vmatprep.subr.mxu0 0.0
      %498 = vmatpush1.xpose.msra.mxu0 0.0
      %499 = vmatprep.subr.mxu0 0.0
      %500 = vmatpush1.xpose.msra.mxu0 0.0
      %501 = vmatprep.subr.mxu0 0.0
      %502 = vmatpush1.xpose.msra.mxu0 0.0
      %503 = vmatprep.subr.mxu0 0.0
      %504 = vmatpush1.xpose.msra.mxu0 0.0
      %505 = vmatprep.subr.mxu0 0.0
      %506 = vmatpush1.xpose.msra.mxu0 0.0
      %507 = vmatprep.mubr.f32.mxu0 0.0
      %508 = vmatmul.mubr.f32.gmra.mrb[0].mxu0 %v392
      %v509 = vpop.f32.mrb[0].mxu0
      %v510 = vadd.f32 0.0, %v509
      %v511 = vpop.f32.mrb[0].mxu0
      %512 = vmatprep.mubr.f32.mxu0 0.0
      %513 = vmatmul.mubr.f32.gmra.mrb[0].mxu0 %v395
      %v514 = vpop.f32.mrb[0].mxu0
      %v515 = vadd.f32 0.0, %v514
      %v516 = vpop.f32.mrb[0].mxu0
      %517 = vmatprep.mubr.f32.mxu0 0.0
      %518 = vmatmul.mubr.f32.gmra.mrb[0].mxu0 %v398
      %v519 = vpop.f32.mrb[0].mxu0
      %v520 = vadd.f32 0.0, %v519
      %v521 = vpop.f32.mrb[0].mxu0
      %522 = vmatprep.mubr.f32.mxu0 0.0
      %523 = vmatmul.mubr.f32.gmra.mrb[0].mxu0 %v401
      %v524 = vpop.f32.mrb[0].mxu0
      %v525 = vadd.f32 0.0, %v524
      %v526 = vpop.f32.mrb[0].mxu0
      %527 = vmatprep.mubr.f32.mxu0 0.0
      %528 = vmatmul.mubr.f32.gmra.mrb[0].mxu0 %v404
      %v529 = vpop.f32.mrb[0].mxu0
      %v530 = vadd.f32 0.0, %v529
      %v531 = vpop.f32.mrb[0].mxu0
      %532 = vmatprep.mubr.f32.mxu0 0.0
      %533 = vmatmul.mubr.f32.gmra.mrb[0].mxu0 %v407
      %v534 = vpop.f32.mrb[0].mxu0
      %v535 = vadd.f32 0.0, %v534
      %v536 = vpop.f32.mrb[0].mxu0
      %537 = vmatprep.mubr.f32.mxu0 0.0
      %538 = vmatmul.mubr.f32.gmra.mrb[0].mxu0 %v410
      %v539 = vpop.f32.mrb[0].mxu0
      %v540 = vadd.f32 0.0, %v539
      %v541 = vpop.f32.mrb[0].mxu0
      %542 = vmatprep.mubr.f32.mxu0 0.0
      %543 = vmatmul.mubr.f32.gmra.mrb[0].mxu0 %v413
      %v544 = vpop.f32.mrb[0].mxu0
      %v545 = vadd.f32 0.0, %v544
      %v546 = vpop.f32.mrb[0].mxu0
      %547 = vmatprep.mubr.f32.mxu0 0.0
      %548 = vmatmul.mubr.f32.gmra.mrb[0].mxu0 %v416
      %v549 = vpop.f32.mrb[0].mxu0
      %v550 = vadd.f32 0.0, %v549
      %v551 = vpop.f32.mrb[0].mxu0
      %552 = vmatprep.mubr.f32.mxu0 0.0
      %553 = vmatmul.mubr.f32.gmra.mrb[0].mxu0 %v419
      %v554 = vpop.f32.mrb[0].mxu0
      %v555 = vadd.f32 0.0, %v554
      %v556 = vpop.f32.mrb[0].mxu0
      %557 = vmatprep.mubr.f32.mxu0 0.0
      %558 = vmatmul.mubr.f32.gmra.mrb[0].mxu0 %v422
      %v559 = vpop.f32.mrb[0].mxu0
      %v560 = vadd.f32 0.0, %v559
      %v561 = vpop.f32.mrb[0].mxu0
      %562 = vmatprep.mubr.f32.mxu0 0.0
      %563 = vmatmul.mubr.f32.gmra.mrb[0].mxu0 %v425
      %v564 = vpop.f32.mrb[0].mxu0
      %v565 = vadd.f32 0.0, %v564
      %v566 = vpop.f32.mrb[0].mxu0
      %567 = vmatprep.mubr.f32.mxu0 0.0
      %568 = vmatmul.mubr.f32.gmra.mrb[0].mxu0 %v428
      %v569 = vpop.f32.mrb[0].mxu0
      %v570 = vadd.f32 0.0, %v569
      %v571 = vpop.f32.mrb[0].mxu0
      %572 = vmatprep.mubr.f32.mxu0 0.0
      %573 = vmatmul.mubr.f32.gmra.mrb[0].mxu0 %v431
      %v574 = vpop.f32.mrb[0].mxu0
      %v575 = vadd.f32 0.0, %v574
      %v576 = vpop.f32.mrb[0].mxu0
      %577 = vmatprep.mubr.f32.mxu0 0.0
      %578 = vmatmul.mubr.f32.gmra.mrb[0].mxu0 %v434
      %v579 = vpop.f32.mrb[0].mxu0
      %v580 = vadd.f32 0.0, %v579
      %v581 = vpop.f32.mrb[0].mxu0
      %582 = vmatprep.mubr.f32.mxu0 0.0
      %583 = vmatmul.mubr.f32.gmra.mrb[0].mxu0 %v437
      %v584 = vpop.f32.mrb[0].mxu0
      %v585 = vadd.f32 0.0, %v584
      %v586 = vpop.f32.mrb[0].mxu0
      %587 = vdwg.mxu0
      %v588 = vmul.f32 %v510, 0.35355338
      %v589 = vmul.f32 %v515, 0.35355338
      %v590 = vmul.f32 %v520, 0.35355338
      %v591 = vmul.f32 %v525, 0.35355338
      %v592 = vmul.f32 %v530, 0.35355338
      %v593 = vmul.f32 %v535, 0.35355338
      %v594 = vmul.f32 %v540, 0.35355338
      %v595 = vmul.f32 %v545, 0.35355338
      %v596 = vmul.f32 %v550, 0.35355338
      %v597 = vmul.f32 %v555, 0.35355338
      %v598 = vmul.f32 %v560, 0.35355338
      %v599 = vmul.f32 %v565, 0.35355338
      %v600 = vmul.f32 %v570, 0.35355338
      %v601 = vmul.f32 %v575, 0.35355338
      %v602 = vmul.f32 %v580, 0.35355338
      %v603 = vmul.f32 %v585, 0.35355338
      %vm604 = vcmask 130048
      %v605 = vsel %vm604, %v588, -inf
      %606 = vmax.xlane.f32.xlu0 %v605
      %v607 = vpop.xlane.xlu0 %606
      %v608 = vsel %vm604, %v589, -inf
      %609 = vmax.xlane.f32.xlu0 %v608
      %v610 = vpop.xlane.xlu0 %609
      %v611 = vsel %vm604, %v590, -inf
      %612 = vmax.xlane.f32.xlu0 %v611
      %v613 = vpop.xlane.xlu0 %612
      %v614 = vsel %vm604, %v591, -inf
      %615 = vmax.xlane.f32.xlu0 %v614
      %v616 = vpop.xlane.xlu0 %615
      %v617 = vsel %vm604, %v592, -inf
      %618 = vmax.xlane.f32.xlu0 %v617
      %v619 = vpop.xlane.xlu0 %618
      %v620 = vsel %vm604, %v593, -inf
      %621 = vmax.xlane.f32.xlu0 %v620
      %v622 = vpop.xlane.xlu0 %621
      %v623 = vsel %vm604, %v594, -inf
      %624 = vmax.xlane.f32.xlu0 %v623
      %v625 = vpop.xlane.xlu0 %624
      %v626 = vsel %vm604, %v595, -inf
      %627 = vmax.xlane.f32.xlu0 %v626
      %v628 = vpop.xlane.xlu0 %627
      %v629 = vsel %vm604, %v596, -inf
      %630 = vmax.xlane.f32.xlu0 %v629
      %v631 = vpop.xlane.xlu0 %630
      %v632 = vsel %vm604, %v597, -inf
      %633 = vmax.xlane.f32.xlu0 %v632
      %v634 = vpop.xlane.xlu0 %633
      %v635 = vsel %vm604, %v598, -inf
      %636 = vmax.xlane.f32.xlu0 %v635
      %v637 = vpop.xlane.xlu0 %636
      %v638 = vsel %vm604, %v599, -inf
      %639 = vmax.xlane.f32.xlu0 %v638
      %v640 = vpop.xlane.xlu0 %639
      %v641 = vsel %vm604, %v600, -inf
      %642 = vmax.xlane.f32.xlu0 %v641
      %v643 = vpop.xlane.xlu0 %642
      %v644 = vsel %vm604, %v601, -inf
      %645 = vmax.xlane.f32.xlu0 %v644
      %v646 = vpop.xlane.xlu0 %645
      %v647 = vsel %vm604, %v602, -inf
      %648 = vmax.xlane.f32.xlu0 %v647
      %v649 = vpop.xlane.xlu0 %648
      %v650 = vsel %vm604, %v603, -inf
      %651 = vmax.xlane.f32.xlu0 %v650
      %v652 = vpop.xlane.xlu0 %651
      %v653 = vsub.f32 %v588, %v607
      %v654 = vsub.f32 %v589, %v610
      %v655 = vsub.f32 %v590, %v613
      %v656 = vsub.f32 %v591, %v616
      %v657 = vsub.f32 %v592, %v619
      %v658 = vsub.f32 %v593, %v622
      %v659 = vsub.f32 %v594, %v625
      %v660 = vsub.f32 %v595, %v628
      %v661 = vsub.f32 %v596, %v631
      %v662 = vsub.f32 %v597, %v634
      %v663 = vsub.f32 %v598, %v637
      %v664 = vsub.f32 %v599, %v640
      %v665 = vsub.f32 %v600, %v643
      %v666 = vsub.f32 %v601, %v646
      %v667 = vsub.f32 %v602, %v649
      %v668 = vsub.f32 %v603, %v652
      %v669 = vmul.f32 %v653, 1.442695
      %v670 = vpow.pop %v669
      %v671 = vmul.f32 %v654, 1.442695
      %v672 = vpow.pop %v671
      %v673 = vmul.f32 %v655, 1.442695
      %v674 = vpow.pop %v673
      %v675 = vmul.f32 %v656, 1.442695
      %v676 = vpow.pop %v675
      %v677 = vmul.f32 %v657, 1.442695
      %v678 = vpow.pop %v677
      %v679 = vmul.f32 %v658, 1.442695
      %v680 = vpow.pop %v679
      %v681 = vmul.f32 %v659, 1.442695
      %v682 = vpow.pop %v681
      %v683 = vmul.f32 %v660, 1.442695
      %v684 = vpow.pop %v683
      %v685 = vmul.f32 %v661, 1.442695
      %v686 = vpow.pop %v685
      %v687 = vmul.f32 %v662, 1.442695
      %v688 = vpow.pop %v687
      %v689 = vmul.f32 %v663, 1.442695
      %v690 = vpow.pop %v689
      %v691 = vmul.f32 %v664, 1.442695
      %v692 = vpow.pop %v691
      %v693 = vmul.f32 %v665, 1.442695
      %v694 = vpow.pop %v693
      %v695 = vmul.f32 %v666, 1.442695
      %v696 = vpow.pop %v695
      %v697 = vmul.f32 %v667, 1.442695
      %v698 = vpow.pop %v697
      %v699 = vmul.f32 %v668, 1.442695
      %v700 = vpow.pop %v699
      %v701 = vsel %vm604, %v670, 0.0
      %702 = vadd.xlane.f32.xlu0 %v701
      %v703 = vpop.xlane.xlu0 %702
      %v704 = vsel %vm604, %v672, 0.0
      %705 = vadd.xlane.f32.xlu0 %v704
      %v706 = vpop.xlane.xlu0 %705
      %v707 = vsel %vm604, %v674, 0.0
      %708 = vadd.xlane.f32.xlu0 %v707
      %v709 = vpop.xlane.xlu0 %708
      %v710 = vsel %vm604, %v676, 0.0
      %711 = vadd.xlane.f32.xlu0 %v710
      %v712 = vpop.xlane.xlu0 %711
      %v713 = vsel %vm604, %v678, 0.0
      %714 = vadd.xlane.f32.xlu0 %v713
      %v715 = vpop.xlane.xlu0 %714
      %v716 = vsel %vm604, %v680, 0.0
      %717 = vadd.xlane.f32.xlu0 %v716
      %v718 = vpop.xlane.xlu0 %717
      %v719 = vsel %vm604, %v682, 0.0
      %720 = vadd.xlane.f32.xlu0 %v719
      %v721 = vpop.xlane.xlu0 %720
      %v722 = vsel %vm604, %v684, 0.0
      %723 = vadd.xlane.f32.xlu0 %v722
      %v724 = vpop.xlane.xlu0 %723
      %v725 = vsel %vm604, %v686, 0.0
      %726 = vadd.xlane.f32.xlu0 %v725
      %v727 = vpop.xlane.xlu0 %726
      %v728 = vsel %vm604, %v688, 0.0
      %729 = vadd.xlane.f32.xlu0 %v728
      %v730 = vpop.xlane.xlu0 %729
      %v731 = vsel %vm604, %v690, 0.0
      %732 = vadd.xlane.f32.xlu0 %v731
      %v733 = vpop.xlane.xlu0 %732
      %v734 = vsel %vm604, %v692, 0.0
      %735 = vadd.xlane.f32.xlu0 %v734
      %v736 = vpop.xlane.xlu0 %735
      %v737 = vsel %vm604, %v694, 0.0
      %738 = vadd.xlane.f32.xlu0 %v737
      %v739 = vpop.xlane.xlu0 %738
      %v740 = vsel %vm604, %v696, 0.0
      %741 = vadd.xlane.f32.xlu0 %v740
      %v742 = vpop.xlane.xlu0 %741
      %v743 = vsel %vm604, %v698, 0.0
      %744 = vadd.xlane.f32.xlu0 %v743
      %v745 = vpop.xlane.xlu0 %744
      %v746 = vsel %vm604, %v700, 0.0
      %747 = vadd.xlane.f32.xlu0 %v746
      %v748 = vpop.xlane.xlu0 %747
      %v749 = vrcp.pop %v703
      %v750 = vmul.f32 1.0, %v749
      %v751 = vrcp.pop %v706
      %v752 = vmul.f32 1.0, %v751
      %v753 = vrcp.pop %v709
      %v754 = vmul.f32 1.0, %v753
      %v755 = vrcp.pop %v712
      %v756 = vmul.f32 1.0, %v755
      %v757 = vrcp.pop %v715
      %v758 = vmul.f32 1.0, %v757
      %v759 = vrcp.pop %v718
      %v760 = vmul.f32 1.0, %v759
      %v761 = vrcp.pop %v721
      %v762 = vmul.f32 1.0, %v761
      %v763 = vrcp.pop %v724
      %v764 = vmul.f32 1.0, %v763
      %v765 = vrcp.pop %v727
      %v766 = vmul.f32 1.0, %v765
      %v767 = vrcp.pop %v730
      %v768 = vmul.f32 1.0, %v767
      %v769 = vrcp.pop %v733
      %v770 = vmul.f32 1.0, %v769
      %v771 = vrcp.pop %v736
      %v772 = vmul.f32 1.0, %v771
      %v773 = vrcp.pop %v739
      %v774 = vmul.f32 1.0, %v773
      %v775 = vrcp.pop %v742
      %v776 = vmul.f32 1.0, %v775
      %v777 = vrcp.pop %v745
      %v778 = vmul.f32 1.0, %v777
      %v779 = vrcp.pop %v748
      %v780 = vmul.f32 1.0, %v779
      %v781 = vmul.f32 %v670, %v750
      %v782 = vmul.f32 %v672, %v752
      %v783 = vmul.f32 %v674, %v754
      %v784 = vmul.f32 %v676, %v756
      %v785 = vmul.f32 %v678, %v758
      %v786 = vmul.f32 %v680, %v760
      %v787 = vmul.f32 %v682, %v762
      %v788 = vmul.f32 %v684, %v764
      %v789 = vmul.f32 %v686, %v766
      %v790 = vmul.f32 %v688, %v768
      %v791 = vmul.f32 %v690, %v770
      %v792 = vmul.f32 %v692, %v772
      %v793 = vmul.f32 %v694, %v774
      %v794 = vmul.f32 %v696, %v776
      %v795 = vmul.f32 %v698, %v778
      %v796 = vmul.f32 %v700, %v780
      %797 = vrot.lane.b32.xlu0 %v275, 64
      %v798 = vpop.permute.xlu0 %797
      %799 = vrot.lane.b32.xlu0 %v276, 64
      %v800 = vpop.permute.xlu0 %799
      %v804 = vsel %vm604, %v781, 0
      %v807 = vsel %vm604, %v782, 0
      %v810 = vsel %vm604, %v783, 0
      %v813 = vsel %vm604, %v784, 0
      %v816 = vsel %vm604, %v785, 0
      %v819 = vsel %vm604, %v786, 0
      %v822 = vsel %vm604, %v787, 0
      %v825 = vsel %vm604, %v788, 0
      %v828 = vsel %vm604, %v789, 0
      %v831 = vsel %vm604, %v790, 0
      %v834 = vsel %vm604, %v791, 0
      %v837 = vsel %vm604, %v792, 0
      %v840 = vsel %vm604, %v793, 0
      %v843 = vsel %vm604, %v794, 0
      %v846 = vsel %vm604, %v795, 0
      %v849 = vsel %vm604, %v796, 0
      %851 = vmatprep.subr.mxu0 0.0
      %852 = vmatpush1.msra.mxu0 %v798
      %853 = vmatprep.subr.mxu0 0.0
      %854 = vmatpush1.msra.mxu0 %v800
      %855 = vmatprep.subr.mxu0 0.0
      %856 = vmatpush1.msra.mxu0 0.0
      %857 = vmatprep.subr.mxu0 0.0
      %858 = vmatpush1.msra.mxu0 0.0
      %859 = vmatprep.subr.mxu0 0.0
      %860 = vmatpush1.msra.mxu0 0.0
      %861 = vmatprep.subr.mxu0 0.0
      %862 = vmatpush1.msra.mxu0 0.0
      %863 = vmatprep.subr.mxu0 0.0
      %864 = vmatpush1.msra.mxu0 0.0
      %865 = vmatprep.subr.mxu0 0.0
      %866 = vmatpush1.msra.mxu0 0.0
      %867 = vmatprep.subr.mxu0 0.0
      %868 = vmatpush1.msra.mxu0 0.0
      %869 = vmatprep.subr.mxu0 0.0
      %870 = vmatpush1.msra.mxu0 0.0
      %871 = vmatprep.subr.mxu0 0.0
      %872 = vmatpush1.msra.mxu0 0.0
      %873 = vmatprep.subr.mxu0 0.0
      %874 = vmatpush1.msra.mxu0 0.0
      %875 = vmatprep.subr.mxu0 0.0
      %876 = vmatpush1.msra.mxu0 0.0
      %877 = vmatprep.subr.mxu0 0.0
      %878 = vmatpush1.msra.mxu0 0.0
      %879 = vmatprep.subr.mxu0 0.0
      %880 = vmatpush1.msra.mxu0 0.0
      %881 = vmatprep.subr.mxu0 0.0
      %882 = vmatpush1.msra.mxu0 0.0
      %883 = vmatprep.subr.mxu0 0.0
      %884 = vmatpush1.msra.mxu0 0.0
      %885 = vmatprep.subr.mxu0 0.0
      %886 = vmatpush1.msra.mxu0 0.0
      %887 = vmatprep.subr.mxu0 0.0
      %888 = vmatpush1.msra.mxu0 0.0
      %889 = vmatprep.subr.mxu0 0.0
      %890 = vmatpush1.msra.mxu0 0.0
      %891 = vmatprep.subr.mxu0 0.0
      %892 = vmatpush1.msra.mxu0 0.0
      %893 = vmatprep.subr.mxu0 0.0
      %894 = vmatpush1.msra.mxu0 0.0
      %895 = vmatprep.subr.mxu0 0.0
      %896 = vmatpush1.msra.mxu0 0.0
      %897 = vmatprep.subr.mxu0 0.0
      %898 = vmatpush1.msra.mxu0 0.0
      %899 = vmatprep.subr.mxu0 0.0
      %900 = vmatpush1.msra.mxu0 0.0
      %901 = vmatprep.subr.mxu0 0.0
      %902 = vmatpush1.msra.mxu0 0.0
      %903 = vmatprep.subr.mxu0 0.0
      %904 = vmatpush1.msra.mxu0 0.0
      %905 = vmatprep.subr.mxu0 0.0
      %906 = vmatpush1.msra.mxu0 0.0
      %907 = vmatprep.subr.mxu0 0.0
      %908 = vmatpush1.msra.mxu0 0.0
      %909 = vmatprep.subr.mxu0 0.0
      %910 = vmatpush1.msra.mxu0 0.0
      %911 = vmatprep.subr.mxu0 0.0
      %912 = vmatpush1.msra.mxu0 0.0
      %913 = vmatprep.subr.mxu0 0.0
      %914 = vmatpush1.msra.mxu0 0.0
      %915 = vmatprep.mubr.f32.mxu0 0.0
      %916 = vmatmul.mubr.f32.gmra.mrb[0].mxu0 %v804
      %v917 = vpop.f32.mrb[0].mxu0
      %v918 = vadd.f32 0.0, %v917
      %v919 = vpop.f32.mrb[0].mxu0
      %920 = vmatprep.mubr.f32.mxu0 0.0
      %921 = vmatmul.mubr.f32.gmra.mrb[0].mxu0 %v807
      %v922 = vpop.f32.mrb[0].mxu0
      %v923 = vadd.f32 0.0, %v922
      %v924 = vpop.f32.mrb[0].mxu0
      %925 = vmatprep.mubr.f32.mxu0 0.0
      %926 = vmatmul.mubr.f32.gmra.mrb[0].mxu0 %v810
      %v927 = vpop.f32.mrb[0].mxu0
      %v928 = vadd.f32 0.0, %v927
      %v929 = vpop.f32.mrb[0].mxu0
      %930 = vmatprep.mubr.f32.mxu0 0.0
      %931 = vmatmul.mubr.f32.gmra.mrb[0].mxu0 %v813
      %v932 = vpop.f32.mrb[0].mxu0
      %v933 = vadd.f32 0.0, %v932
      %v934 = vpop.f32.mrb[0].mxu0
      %935 = vmatprep.mubr.f32.mxu0 0.0
      %936 = vmatmul.mubr.f32.gmra.mrb[0].mxu0 %v816
      %v937 = vpop.f32.mrb[0].mxu0
      %v938 = vadd.f32 0.0, %v937
      %v939 = vpop.f32.mrb[0].mxu0
      %940 = vmatprep.mubr.f32.mxu0 0.0
      %941 = vmatmul.mubr.f32.gmra.mrb[0].mxu0 %v819
      %v942 = vpop.f32.mrb[0].mxu0
      %v943 = vadd.f32 0.0, %v942
      %v944 = vpop.f32.mrb[0].mxu0
      %945 = vmatprep.mubr.f32.mxu0 0.0
      %946 = vmatmul.mubr.f32.gmra.mrb[0].mxu0 %v822
      %v947 = vpop.f32.mrb[0].mxu0
      %v948 = vadd.f32 0.0, %v947
      %v949 = vpop.f32.mrb[0].mxu0
      %950 = vmatprep.mubr.f32.mxu0 0.0
      %951 = vmatmul.mubr.f32.gmra.mrb[0].mxu0 %v825
      %v952 = vpop.f32.mrb[0].mxu0
      %v953 = vadd.f32 0.0, %v952
      %v954 = vpop.f32.mrb[0].mxu0
      %955 = vmatprep.mubr.f32.mxu0 0.0
      %956 = vmatmul.mubr.f32.gmra.mrb[0].mxu0 %v828
      %v957 = vpop.f32.mrb[0].mxu0
      %v958 = vadd.f32 0.0, %v957
      %v959 = vpop.f32.mrb[0].mxu0
      %960 = vmatprep.mubr.f32.mxu0 0.0
      %961 = vmatmul.mubr.f32.gmra.mrb[0].mxu0 %v831
      %v962 = vpop.f32.mrb[0].mxu0
      %v963 = vadd.f32 0.0, %v962
      %v964 = vpop.f32.mrb[0].mxu0
      %965 = vmatprep.mubr.f32.mxu0 0.0
      %966 = vmatmul.mubr.f32.gmra.mrb[0].mxu0 %v834
      %v967 = vpop.f32.mrb[0].mxu0
      %v968 = vadd.f32 0.0, %v967
      %v969 = vpop.f32.mrb[0].mxu0
      %970 = vmatprep.mubr.f32.mxu0 0.0
      %971 = vmatmul.mubr.f32.gmra.mrb[0].mxu0 %v837
      %v972 = vpop.f32.mrb[0].mxu0
      %v973 = vadd.f32 0.0, %v972
      %v974 = vpop.f32.mrb[0].mxu0
      %975 = vmatprep.mubr.f32.mxu0 0.0
      %976 = vmatmul.mubr.f32.gmra.mrb[0].mxu0 %v840
      %v977 = vpop.f32.mrb[0].mxu0
      %v978 = vadd.f32 0.0, %v977
      %v979 = vpop.f32.mrb[0].mxu0
      %980 = vmatprep.mubr.f32.mxu0 0.0
      %981 = vmatmul.mubr.f32.gmra.mrb[0].mxu0 %v843
      %v982 = vpop.f32.mrb[0].mxu0
      %v983 = vadd.f32 0.0, %v982
      %v984 = vpop.f32.mrb[0].mxu0
      %985 = vmatprep.mubr.f32.mxu0 0.0
      %986 = vmatmul.mubr.f32.gmra.mrb[0].mxu0 %v846
      %v987 = vpop.f32.mrb[0].mxu0
      %v988 = vadd.f32 0.0, %v987
      %v989 = vpop.f32.mrb[0].mxu0
      %990 = vmatprep.mubr.f32.mxu0 0.0
      %991 = vmatmul.mubr.f32.gmra.mrb[0].mxu0 %v849
      %v992 = vpop.f32.mrb[0].mxu0
      %v993 = vadd.f32 0.0, %v992
      %v994 = vpop.f32.mrb[0].mxu0
      %995 = vdwg.mxu0
      %v996 = vmul.f32 %v918, %v331
      %v997 = vmul.f32 %v923, %v331
      %v998 = vmul.f32 %v928, %v335
      %v999 = vmul.f32 %v933, %v335
      %v1000 = vmul.f32 %v938, %v339
      %v1001 = vmul.f32 %v943, %v339
      %v1002 = vmul.f32 %v948, %v343
      %v1003 = vmul.f32 %v953, %v343
      %v1004 = vmul.f32 %v958, %v347
      %v1005 = vmul.f32 %v963, %v347
      %v1006 = vmul.f32 %v968, %v351
      %v1007 = vmul.f32 %v973, %v351
      %v1008 = vmul.f32 %v978, %v355
      %v1009 = vmul.f32 %v983, %v355
      %v1010 = vmul.f32 %v988, %v359
      %v1011 = vmul.f32 %v993, %v359
      %v1012 = vsel %vm390, %v996, 0.0
      %v1013 = vsel %vm390, %v998, 0.0
      %v1014 = vadd.f32 %v1012, %v1013
      %v1015 = vsel %vm390, %v1000, 0.0
      %v1016 = vadd.f32 %v1014, %v1015
      %v1017 = vsel %vm390, %v1002, 0.0
      %v1018 = vadd.f32 %v1016, %v1017
      %v1019 = vsel %vm390, %v1004, 0.0
      %v1020 = vadd.f32 %v1018, %v1019
      %v1021 = vsel %vm390, %v1006, 0.0
      %v1022 = vadd.f32 %v1020, %v1021
      %v1023 = vsel %vm390, %v1008, 0.0
      %v1024 = vadd.f32 %v1022, %v1023
      %v1025 = vsel %vm390, %v1010, 0.0
      %v1026 = vadd.f32 %v1024, %v1025
      %v1027 = vsel %vm390, %v997, 0.0
      %v1028 = vsel %vm390, %v999, 0.0
      %v1029 = vadd.f32 %v1027, %v1028
      %v1030 = vsel %vm390, %v1001, 0.0
      %v1031 = vadd.f32 %v1029, %v1030
      %v1032 = vsel %vm390, %v1003, 0.0
      %v1033 = vadd.f32 %v1031, %v1032
      %v1034 = vsel %vm390, %v1005, 0.0
      %v1035 = vadd.f32 %v1033, %v1034
      %v1036 = vsel %vm390, %v1007, 0.0
      %v1037 = vadd.f32 %v1035, %v1036
      %v1038 = vsel %vm390, %v1009, 0.0
      %v1039 = vadd.f32 %v1037, %v1038
      %v1040 = vsel %vm390, %v1011, 0.0
      %v1041 = vadd.f32 %v1039, %v1040
      %v1042 = vld [vmem:[%s4] sm:$0xff]
      %v1043 = vld [vmem:[%s4 + $0x8] sm:$0xff]
      %v1044 = vld [vmem:[%s4 + $0x10] sm:$0xff]
      %v1045 = vld [vmem:[%s4 + $0x18] sm:$0xff]
      %v1046 = vld [vmem:[%s5] sm:$0x1]
      %v1048 = vlaneseq
      %v1049 = vshrl.u32 %v1048, 7
      %v1050 = vsub.s32 0, %v1049
      %v1051 = vrot.slane %v1046, %v1050
      %v1054 = vsel %vm390, %v1026, 0
      %v1057 = vsel %vm390, %v1041, 0
      %1059 = vmatprep.subr.mxu0 0.0
      %1060 = vmatpush1.msra.mxu0 %v1042
      %1061 = vmatprep.subr.mxu0 0.0
      %1062 = vmatpush1.msra.mxu0 %v1043
      %1063 = vmatprep.subr.mxu0 0.0
      %1064 = vmatpush1.msra.mxu0 %v1044
      %1065 = vmatprep.subr.mxu0 0.0
      %1066 = vmatpush1.msra.mxu0 %v1045
      %1067 = vmatprep.subr.mxu0 0.0
      %1068 = vmatpush1.msra.mxu0 0.0
      %1069 = vmatprep.subr.mxu0 0.0
      %1070 = vmatpush1.msra.mxu0 0.0
      %1071 = vmatprep.subr.mxu0 0.0
      %1072 = vmatpush1.msra.mxu0 0.0
      %1073 = vmatprep.subr.mxu0 0.0
      %1074 = vmatpush1.msra.mxu0 0.0
      %1075 = vmatprep.subr.mxu0 0.0
      %1076 = vmatpush1.msra.mxu0 0.0
      %1077 = vmatprep.subr.mxu0 0.0
      %1078 = vmatpush1.msra.mxu0 0.0
      %1079 = vmatprep.subr.mxu0 0.0
      %1080 = vmatpush1.msra.mxu0 0.0
      %1081 = vmatprep.subr.mxu0 0.0
      %1082 = vmatpush1.msra.mxu0 0.0
      %1083 = vmatprep.subr.mxu0 0.0
      %1084 = vmatpush1.msra.mxu0 0.0
      %1085 = vmatprep.subr.mxu0 0.0
      %1086 = vmatpush1.msra.mxu0 0.0
      %1087 = vmatprep.subr.mxu0 0.0
      %1088 = vmatpush1.msra.mxu0 0.0
      %1089 = vmatprep.subr.mxu0 0.0
      %1090 = vmatpush1.msra.mxu0 0.0
      %1091 = vmatprep.subr.mxu0 0.0
      %1092 = vmatpush1.msra.mxu0 0.0
      %1093 = vmatprep.subr.mxu0 0.0
      %1094 = vmatpush1.msra.mxu0 0.0
      %1095 = vmatprep.subr.mxu0 0.0
      %1096 = vmatpush1.msra.mxu0 0.0
      %1097 = vmatprep.subr.mxu0 0.0
      %1098 = vmatpush1.msra.mxu0 0.0
      %1099 = vmatprep.subr.mxu0 0.0
      %1100 = vmatpush1.msra.mxu0 0.0
      %1101 = vmatprep.subr.mxu0 0.0
      %1102 = vmatpush1.msra.mxu0 0.0
      %1103 = vmatprep.subr.mxu0 0.0
      %1104 = vmatpush1.msra.mxu0 0.0
      %1105 = vmatprep.subr.mxu0 0.0
      %1106 = vmatpush1.msra.mxu0 0.0
      %1107 = vmatprep.subr.mxu0 0.0
      %1108 = vmatpush1.msra.mxu0 0.0
      %1109 = vmatprep.subr.mxu0 0.0
      %1110 = vmatpush1.msra.mxu0 0.0
      %1111 = vmatprep.subr.mxu0 0.0
      %1112 = vmatpush1.msra.mxu0 0.0
      %1113 = vmatprep.subr.mxu0 0.0
      %1114 = vmatpush1.msra.mxu0 0.0
      %1115 = vmatprep.subr.mxu0 0.0
      %1116 = vmatpush1.msra.mxu0 0.0
      %1117 = vmatprep.subr.mxu0 0.0
      %1118 = vmatpush1.msra.mxu0 0.0
      %1119 = vmatprep.subr.mxu0 0.0
      %1120 = vmatpush1.msra.mxu0 0.0
      %1121 = vmatprep.subr.mxu0 0.0
      %1122 = vmatpush1.msra.mxu0 0.0
      %1123 = vmatprep.mubr.f32.mxu0 0.0
      %1124 = vmatmul.mubr.f32.gmra.mrb[0].mxu0 %v1054
      %v1125 = vpop.f32.mrb[0].mxu0
      %v1126 = vadd.f32 %v1051, %v1125
      %v1127 = vpop.f32.mrb[0].mxu0
      %1128 = vmatprep.mubr.f32.mxu0 0.0
      %1129 = vmatmul.mubr.f32.gmra.mrb[0].mxu0 %v1057
      %v1130 = vpop.f32.mrb[0].mxu0
      %v1131 = vadd.f32 %v1051, %v1130
      %v1132 = vpop.f32.mrb[0].mxu0
      %1133 = vdwg.mxu0
      %1134 = vst.msk [vmem:[%s253] sm:$0xff] %vm390, %v1126
      %1135 = vst.msk [vmem:[%s253 + $0x8] sm:$0xff] %vm390, %v1131
      %s1136 = smul.u32 2, %s17
      %p1137 = scmp.lt.s32.totalorder %s1136, 7
      %s1138 = scalar_select %p1137, %s1136, 7
      %s1139 = smul.addr %s1138, 8
      %s1140 = scalar_lea.vmem %s6, %s1139
      // Predicated region
      $region45: #{adaptive_graph_learner.4} parent=43 // pred_check
        %p1141 = pneg %p166
      $region46: #{adaptive_graph_learner.4} parent=43 // pred_check_branch
        %1143 = sbr.rel (%p1141) target = $region48
      $region47: #{adaptive_graph_learner.4} parent=43 // pred_region
        %s1144 = smul.u32 2, %s17
      $region48: #{adaptive_graph_learner.4} parent=43 // pred_fallthru
        _
    $region44: #{adaptive_graph_learner.4} parent=5 // pred_fallthru
      _
    %p1145 = scmp.le.s32.totalorder 2, %s12
    // Predicated region
    $region49: #{adaptive_graph_learner.4} parent=5 // pred_check
      %p1146 = pneg %p1145
    $region50: #{adaptive_graph_learner.4} parent=5 // pred_check_branch
      %1148 = sbr.rel (%p1146) target = $region52
    $region51: #{adaptive_graph_learner.4} parent=5 // pred_region
      %s1149 = ssub.s32 %s12, 2
      // Predicated region
      $region53: #{adaptive_graph_learner.4} parent=51 // pred_check
        %p1150 = pneg %p172
      $region54: #{adaptive_graph_learner.4} parent=51 // pred_check_branch
        %1152 = sbr.rel (%p1150) target = $region56
      $region55: #{adaptive_graph_learner.4} parent=51 // pred_region
        %s1153 = smul.u32 2, %s18
        %p1154 = scmp.lt.s32.totalorder %s1153, 7
        %s1155 = scalar_select %p1154, %s1153, 7
        %s1156 = smul.addr %s1155, 8
        %s1157 = scalar_lea.vmem %s6, %s1156
      $region56: #{adaptive_graph_learner.4} parent=51 // pred_fallthru
        _
    $region52: #{adaptive_graph_learner.4} parent=5 // pred_fallthru
      _
  $region6: #{adaptive_graph_learner.4} parent=0 // loop_footer
    %s16 = sadd.s32 1, %s12
  $region7: #{adaptive_graph_learner.4} parent=0 // loop_footer_branch
    %11 = sbr.rel target = $region3
  $region8: #{adaptive_graph_learner.4} parent=0 // loop_exit
    _

</llo_original>
